<compile_context>
chip_gen: v6e
topology: v6e:2x2x1
jax: 0.10.0
libtpu: 0.0.40
codegen_flags: <defaults>
</compile_context>

<pallas_src>
import functools
import math

import jax
import jax.numpy as jnp
from jax.experimental import pallas as pl
from jax.experimental.pallas import tpu as pltpu

SELU_ALPHA = 1.6732632423543772
SELU_SCALE = 1.0507009873554805
MASK_NEG = 1e30
# TODO(synk): `mask_logic` is not defined in the provided snippet; the standard
# definition from the reference repos, x - (1 - adj) * 1e30, is used here.


def _selu(x):
    return SELU_SCALE * jnp.where(
        x > 0, x, SELU_ALPHA * (jnp.exp(jnp.minimum(x, 0.0)) - 1.0))


def edge_gcn_kernel(utt_ref, uttj_ref, edge_ref, bkt_ref, seqj_ref,
                    wkt_ref, wk_ref, wst_ref, out_ref, *, inv_sqrt_din):
    # Shapes (batch dim squeezed away via pl.Squeezed()):
    #   utt_ref : (N, Din)        full utterance block for this batch element
    #   uttj_ref: (TJ, Din)       the j-tile rows of utt
    #   edge_ref: (N, TJ, Din)    edge_rep[:, j-tile, :]   (bf16 stream)
    #   bkt_ref : (TJ, N)         binary_knowledge_adj pre-transposed -> [j, i]
    #   seqj_ref: (TJ, N)         sequence_adj rows of the j-tile
    #   wkt_ref : (Din, Dpad)     knowledge weight, transposed + zero-padded
    #   wk_ref  : (Dpad, Din)     knowledge weight, zero-padded
    #   wst_ref : (Din, Dpad)     sequence weight, transposed + zero-padded
    #   out_ref : (TJ, Dpad)
    utt = utt_ref[...]
    utt_j = uttj_ref[...]
    bkt = bkt_ref[...]
    seq_j = seqj_ref[...]
    wkt = wkt_ref[...]
    wk = wk_ref[...]
    wst = wst_ref[...]

    # zi = knowledge_weight(utt_emb)                                (N, Dpad)
    zi = jnp.dot(utt, wkt, preferred_element_type=jnp.float32)
    # v[i] = zi[i] @ Wk  -- "key" folded back to input space so that
    # logits[i, j] = (utt[j] + edge[i, j]) . v[i]                   (N, Din)
    v = jnp.dot(zi, wk, preferred_element_type=jnp.float32)

    # term1_T[j, i] = utt[j] . v[i]                                 (TJ, N)
    term1_t = jax.lax.dot_general(
        utt_j, v, (((1,), (1,)), ((), ())),
        preferred_element_type=jnp.float32)

    # term2[i, j] = edge[i, j, :] . v[i, :]   (VPU mul + XLU reduce) (N, TJ)
    edge = edge_ref[...].astype(jnp.float32)   # f32 VPU path (v5e-safe)
    term2 = jnp.sum(edge * v[:, None, :], axis=-1)
    term2_t = jnp.transpose(term2)                                 # (TJ, N)

    logits_t = (term1_t + term2_t) * inv_sqrt_din
    logits_t = logits_t - (1.0 - bkt) * MASK_NEG

    # softmax over i (torch dim=1) == last-axis reduction in (j, i) layout.
    m = jnp.max(logits_t, axis=-1, keepdims=True)
    e = jnp.exp(logits_t - m)
    denom = jnp.sum(e, axis=-1, keepdims=True)
    attn_t = e * pl.reciprocal(denom, approx=True) * bkt           # (TJ, N)

    # zi_agg[j] = sum_i attn[i, j] * zi[i]  -> plain MXU matmul.
    zi_agg = jnp.dot(attn_t, zi, preferred_element_type=jnp.float32)

    # Sequence branch.
    si = jnp.dot(utt, wst, preferred_element_type=jnp.float32)     # (N, Dpad)
    deg = jnp.sum(seq_j, axis=-1, keepdims=True)
    seq_norm = seq_j * pl.reciprocal(deg + 1e-10, approx=True)
    si_agg = jnp.dot(seq_norm, si, preferred_element_type=jnp.float32)

    # li = sequence_weight(utt_emb) (self_loop_weight unused in torch forward).
    li = jnp.dot(utt_j, wst, preferred_element_type=jnp.float32)

    out_ref[...] = _selu(zi_agg + si_agg + li)


def _pick_tile_j(n, d_in, edge_itemsize, budget_bytes=8 * 1024 * 1024):
    """Largest j-tile (divisor of N; multiple of 8 unless == N) whose edge
    block fits `budget_bytes` per buffer (Pallas double-buffers it)."""
    candidates = [n] + [t for t in (1024, 512, 256, 128, 64, 32, 16, 8)
                        if t < n and n % t == 0]
    for t in candidates:
        if n * t * d_in * edge_itemsize <= budget_bytes:
            return t
    return candidates[-1]


def edge_gcn_forward(utt_emb, edge_rep, binary_knowledge_adj, sequence_adj,
                     knowledge_weight, sequence_weight, *,
                     stream_edge_bf16=True, tile_j=None):
    """Pallas EdgeGCN forward.

    `knowledge_weight` / `sequence_weight` are the torch `nn.Linear.weight`
    matrices, shape (D_out, D_in); Linear(x) == x @ W.T.
    """
    B, N, D_in = utt_emb.shape
    D_out = knowledge_weight.shape[0]
    D_pad = 128 * pl.cdiv(D_out, 128)      # lane-dense stores / MXU N-dim

    f32 = jnp.float32
    utt = utt_emb.astype(f32)
    bk_t = jnp.swapaxes(binary_knowledge_adj.astype(f32), 1, 2)   # [b, j, i]
    seq = sequence_adj.astype(f32)

    # Dominant HBM traffic streamed narrow; math stays f32 inside the kernel.
    edge = edge_rep
    if stream_edge_bf16 and edge.dtype != jnp.bfloat16:
        edge = edge.astype(jnp.bfloat16)

    # Zero-pad the output feature dim (exact: padded rows of W are zero, so the
    # padded output columns are selu(0) == 0 and are sliced off below).
    def _pad_w(w):
        return jnp.pad(w.astype(f32), ((0, D_pad - D_out), (0, 0)))
    wk_pad = _pad_w(knowledge_weight)      # (Dpad, Din)
    ws_pad = _pad_w(sequence_weight)       # (Dpad, Din)
    wk_t = wk_pad.T                        # (Din, Dpad)
    ws_t = ws_pad.T                        # (Din, Dpad)

    if tile_j is None:
        tile_j = _pick_tile_j(N, D_in, edge.dtype.itemsize)
    assert N % tile_j == 0 and (tile_j == N or tile_j % 8 == 0)
    n_j = N // tile_j

    # Explicit scoped-VMEM budget: double-buffered blocks + generous headroom,
    # clamped under v7x's 64 MiB physical VMEM per TensorCore.
    block_f32 = (N * D_in + tile_j * D_in + 2 * tile_j * N
                 + 3 * D_in * D_pad + tile_j * D_pad)
    vmem_bytes = 2 * (4 * block_f32 + edge.dtype.itemsize * N * tile_j * D_in)
    vmem_limit = int(min(max(4 * vmem_bytes, 16 * 1024 * 1024),
                         48 * 1024 * 1024))

    kernel = functools.partial(edge_gcn_kernel,
                               inv_sqrt_din=1.0 / math.sqrt(D_in))

    grid_spec = pltpu.PrefetchScalarGridSpec(
        num_scalar_prefetch=0,
        grid=(B, n_j),                      # b outer (utt/weights stay put)
        in_specs=[
            pl.BlockSpec((pl.Squeezed(), N, D_in), lambda b, j: (b, 0, 0)),
            pl.BlockSpec((pl.Squeezed(), tile_j, D_in), lambda b, j: (b, j, 0)),
            pl.BlockSpec((pl.Squeezed(), N, tile_j, D_in),
                         lambda b, j: (b, 0, j, 0)),
            pl.BlockSpec((pl.Squeezed(), tile_j, N), lambda b, j: (b, j, 0)),
            pl.BlockSpec((pl.Squeezed(), tile_j, N), lambda b, j: (b, j, 0)),
            pl.BlockSpec((D_in, D_pad), lambda b, j: (0, 0)),
            pl.BlockSpec((D_pad, D_in), lambda b, j: (0, 0)),
            pl.BlockSpec((D_in, D_pad), lambda b, j: (0, 0)),
        ],
        out_specs=pl.BlockSpec((pl.Squeezed(), tile_j, D_pad),
                               lambda b, j: (b, j, 0)),
    )

    out_pad = pl.pallas_call(
        kernel,
        out_shape=jax.ShapeDtypeStruct((B, N, D_pad), f32),
        grid_spec=grid_spec,
        compiler_params=pltpu.CompilerParams(
            dimension_semantics=("parallel", "parallel"),
            vmem_limit_bytes=vmem_limit),
    )(utt, utt, edge, bk_t, seq, wk_t, wk_pad, ws_t)

    return out_pad[..., :D_out]


def reference_forward(utt_emb, edge_rep, bk_adj, seq_adj, wk, ws):
    """Pure-JAX replica of the torch forward (weights in torch (Dout, Din))."""
    d_in = utt_emb.shape[-1]
    zi = utt_emb @ wk.T
    query = (utt_emb[:, None, :, :] + edge_rep) @ wk.T
    key = zi[:, :, None, :]
    logits = jnp.sum(query * key, axis=3) / math.sqrt(d_in)
    logits = logits - (1.0 - bk_adj) * MASK_NEG
    attn = jax.nn.softmax(logits, axis=1) * bk_adj
    zi_agg = jnp.einsum('bij,bid->bjd', attn, zi)
    si = utt_emb @ ws.T
    deg_inv = 1.0 / (seq_adj.sum(-1) + 1e-10)
    seq_norm = seq_adj * deg_inv[:, :, None]
    si_agg = jnp.einsum('bij,bjd->bid', seq_norm, si)
    x = zi_agg + si_agg + si
    return _selu(x)


if __name__ == "__main__":
    B, N, D_in, D_out = 2, 8, 32, 32

    key = jax.random.PRNGKey(0)
    k_utt, k_edge, k_bk, k_seq, k_wk, k_ws, k_wl = jax.random.split(key, 7)

    utt_emb = jax.random.normal(k_utt, (B, N, D_in), dtype=jnp.float32)
    edge_rep = jax.random.normal(k_edge, (B, N, N, D_in), dtype=jnp.float32)
    binary_knowledge_adj = jax.random.bernoulli(
        k_bk, 0.5, (B, N, N)).astype(jnp.float32)
    sequence_adj = jax.random.bernoulli(
        k_seq, 0.5, (B, N, N)).astype(jnp.float32)

    # torch Linear default init: U(-1/sqrt(in), 1/sqrt(in)).
    bound = 1.0 / math.sqrt(D_in)
    wk = jax.random.uniform(k_wk, (D_out, D_in), minval=-bound, maxval=bound,
                            dtype=jnp.float32)   # knowledge_weight.weight
    ws = jax.random.uniform(k_ws, (D_out, D_in), minval=-bound, maxval=bound,
                            dtype=jnp.float32)   # sequence_weight.weight
    _wl = jax.random.uniform(k_wl, (D_out, D_in), minval=-bound, maxval=bound,
                             dtype=jnp.float32)  # self_loop_weight (unused)

    out = edge_gcn_forward(utt_emb, edge_rep, binary_knowledge_adj,
                           sequence_adj, wk, ws)
    out = jax.block_until_ready(out)

    # Reference uses the same bf16-quantized edge_rep the kernel streams, so
    # the remaining differences are the algebraic logits rewrite (~1e-5 rel)
    # and the EUP approximate reciprocals in the normalizations (~1e-3 rel).
    edge_q = edge_rep.astype(jnp.bfloat16).astype(jnp.float32)
    ref = reference_forward(utt_emb, edge_q, binary_knowledge_adj,
                            sequence_adj, wk, ws)

    assert out.shape == (B, N, D_out)
    err = jnp.max(jnp.abs(out - ref))
    assert jnp.allclose(out, ref, rtol=1e-2, atol=1e-2), f"max err {err}"

    print("KERNEL_OK")
</pallas_src>

<mosaic_0001>
module attributes {stable_mosaic.version = 11 : i64} {
  func.func @edge_gcn_kernel(%arg0: i32, %arg1: i32, %arg2: memref<1x8x32xf32, #tpu.memory_space<vmem>>, %arg3: memref<1x8x32xf32, #tpu.memory_space<vmem>>, %arg4: memref<1x8x8x32xbf16, #tpu.memory_space<vmem>>, %arg5: memref<1x8x8xf32, #tpu.memory_space<vmem>>, %arg6: memref<1x8x8xf32, #tpu.memory_space<vmem>>, %arg7: memref<32x128xf32, #tpu.memory_space<vmem>>, %arg8: memref<128x32xf32, #tpu.memory_space<vmem>>, %arg9: memref<32x128xf32, #tpu.memory_space<vmem>>, %arg10: memref<1x8x128xf32, #tpu.memory_space<vmem>>) attributes {dimension_semantics = [#tpu.dimension_semantics<parallel>, #tpu.dimension_semantics<parallel>], iteration_bounds = array<i64: 2, 1>, scalar_prefetch = 0 : i64, scratch_operands = 0 : i64, tpu.core_type = #tpu.core_type<tc>, window_params = [{transform_indices = @transform_0, window_bounds = array<i64: 1, 8, 32>}, {transform_indices = @transform_1, window_bounds = array<i64: 1, 8, 32>}, {transform_indices = @transform_2, window_bounds = array<i64: 1, 8, 8, 32>}, {transform_indices = @transform_3, window_bounds = array<i64: 1, 8, 8>}, {transform_indices = @transform_4, window_bounds = array<i64: 1, 8, 8>}, {pipeline_mode = #tpu.pipeline_mode<synchronous>, transform_indices = @transform_5, window_bounds = array<i64: 32, 128>}, {pipeline_mode = #tpu.pipeline_mode<synchronous>, transform_indices = @transform_6, window_bounds = array<i64: 128, 32>}, {pipeline_mode = #tpu.pipeline_mode<synchronous>, transform_indices = @transform_7, window_bounds = array<i64: 32, 128>}, {transform_indices = @transform_8, window_bounds = array<i64: 1, 8, 128>}]} {
    %c0 = arith.constant 0 : index
    %c0_0 = arith.constant 0 : index
    %c0_1 = arith.constant 0 : index
    %0 = vector.load %arg2[%c0, %c0_0, %c0_1] : memref<1x8x32xf32, #tpu.memory_space<vmem>>, vector<1x8x32xf32>
    %1 = vector.shape_cast %0 : vector<1x8x32xf32> to vector<8x32xf32>
    %c0_2 = arith.constant 0 : index
    %c0_3 = arith.constant 0 : index
    %c0_4 = arith.constant 0 : index
    %2 = vector.load %arg3[%c0_2, %c0_3, %c0_4] : memref<1x8x32xf32, #tpu.memory_space<vmem>>, vector<1x8x32xf32>
    %3 = vector.shape_cast %2 : vector<1x8x32xf32> to vector<8x32xf32>
    %c0_5 = arith.constant 0 : index
    %c0_6 = arith.constant 0 : index
    %c0_7 = arith.constant 0 : index
    %4 = vector.load %arg5[%c0_5, %c0_6, %c0_7] : memref<1x8x8xf32, #tpu.memory_space<vmem>>, vector<1x8x8xf32>
    %5 = vector.shape_cast %4 : vector<1x8x8xf32> to vector<8x8xf32>
    %c0_8 = arith.constant 0 : index
    %c0_9 = arith.constant 0 : index
    %c0_10 = arith.constant 0 : index
    %6 = vector.load %arg6[%c0_8, %c0_9, %c0_10] : memref<1x8x8xf32, #tpu.memory_space<vmem>>, vector<1x8x8xf32>
    %7 = vector.shape_cast %6 : vector<1x8x8xf32> to vector<8x8xf32>
    %c0_11 = arith.constant 0 : index
    %c0_12 = arith.constant 0 : index
    %8 = vector.load %arg7[%c0_11, %c0_12] : memref<32x128xf32, #tpu.memory_space<vmem>>, vector<32x128xf32>
    %c0_13 = arith.constant 0 : index
    %c0_14 = arith.constant 0 : index
    %9 = vector.load %arg8[%c0_13, %c0_14] : memref<128x32xf32, #tpu.memory_space<vmem>>, vector<128x32xf32>
    %c0_15 = arith.constant 0 : index
    %c0_16 = arith.constant 0 : index
    %10 = vector.load %arg9[%c0_15, %c0_16] : memref<32x128xf32, #tpu.memory_space<vmem>>, vector<32x128xf32>
    %cst = arith.constant dense<0.000000e+00> : vector<8x128xf32>
    %11 = tpu.matmul %1, %8, %cst {dimension_numbers = #tpu.dot_dimension_numbers<[1], [0], [0], [1], [0, 0, 1, 1], [], []>} : vector<8x32xf32>, vector<32x128xf32>, vector<8x128xf32> -> vector<8x128xf32>
    %cst_17 = arith.constant dense<0.000000e+00> : vector<8x32xf32>
    %12 = tpu.matmul %11, %9, %cst_17 {dimension_numbers = #tpu.dot_dimension_numbers<[1], [0], [0], [1], [0, 0, 1, 1], [], []>} : vector<8x128xf32>, vector<128x32xf32>, vector<8x32xf32> -> vector<8x32xf32>
    %cst_18 = arith.constant dense<0.000000e+00> : vector<8x8xf32>
    %13 = tpu.matmul %3, %12, %cst_18 {dimension_numbers = #tpu.dot_dimension_numbers<[1], [1], [0], [0], [0, 0, 1, 0], [], []>} : vector<8x32xf32>, vector<8x32xf32>, vector<8x8xf32> -> vector<8x8xf32>
    %c0_19 = arith.constant 0 : index
    %c0_20 = arith.constant 0 : index
    %c0_21 = arith.constant 0 : index
    %c0_22 = arith.constant 0 : index
    %14 = vector.load %arg4[%c0_19, %c0_20, %c0_21, %c0_22] : memref<1x8x8x32xbf16, #tpu.memory_space<vmem>>, vector<1x8x8x32xbf16>
    %15 = vector.shape_cast %14 : vector<1x8x8x32xbf16> to vector<8x8x32xbf16>
    %16 = arith.extf %15 : vector<8x8x32xbf16> to vector<8x8x32xf32>
    %17 = vector.shape_cast %12 : vector<8x32xf32> to vector<8x1x32xf32>
    %18 = vector.broadcast %17 : vector<8x1x32xf32> to vector<8x8x32xf32>
    %19 = arith.mulf %16, %18 : vector<8x8x32xf32>
    %cst_23 = arith.constant dense<0.000000e+00> : vector<8x8xf32>
    %20 = vector.multi_reduction <add>, %19, %cst_23 [2] : vector<8x8x32xf32> to vector<8x8xf32>
    %21 = tpu.transpose %20, [1, 0] : vector<8x8xf32> -> vector<8x8xf32>
    %22 = arith.addf %13, %21 : vector<8x8xf32>
    %cst_24 = arith.constant 0.176776692 : f32
    %23 = vector.broadcast %cst_24 : f32 to vector<8x8xf32>
    %24 = arith.mulf %22, %23 : vector<8x8xf32>
    %cst_25 = arith.constant 1.000000e+00 : f32
    %25 = vector.broadcast %cst_25 : f32 to vector<8x8xf32>
    %26 = arith.subf %25, %5 : vector<8x8xf32>
    %cst_26 = arith.constant 1.000000e+30 : f32
    %27 = vector.broadcast %cst_26 : f32 to vector<8x8xf32>
    %28 = arith.mulf %26, %27 : vector<8x8xf32>
    %29 = arith.subf %24, %28 : vector<8x8xf32>
    %cst_27 = arith.constant dense<0xFF800000> : vector<8xf32>
    %30 = vector.multi_reduction <maximumf>, %29, %cst_27 [1] : vector<8x8xf32> to vector<8xf32>
    %31 = vector.shape_cast %30 : vector<8xf32> to vector<8x1xf32>
    %32 = vector.broadcast %31 : vector<8x1xf32> to vector<8x8xf32>
    %33 = arith.subf %29, %32 : vector<8x8xf32>
    %34 = math.exp %33 : vector<8x8xf32>
    %cst_28 = arith.constant dense<0.000000e+00> : vector<8xf32>
    %35 = vector.multi_reduction <add>, %34, %cst_28 [1] : vector<8x8xf32> to vector<8xf32>
    %36 = vector.shape_cast %35 : vector<8xf32> to vector<8x1xf32>
    %37 = tpu.reciprocal %36 {approx = true} : vector<8x1xf32> -> vector<8x1xf32>
    %38 = vector.broadcast %37 : vector<8x1xf32> to vector<8x8xf32>
    %39 = arith.mulf %34, %38 : vector<8x8xf32>
    %40 = arith.mulf %39, %5 : vector<8x8xf32>
    %cst_29 = arith.constant dense<0.000000e+00> : vector<8x128xf32>
    %41 = tpu.matmul %40, %11, %cst_29 {dimension_numbers = #tpu.dot_dimension_numbers<[1], [0], [0], [1], [0, 0, 1, 1], [], []>} : vector<8x8xf32>, vector<8x128xf32>, vector<8x128xf32> -> vector<8x128xf32>
    %cst_30 = arith.constant dense<0.000000e+00> : vector<8x128xf32>
    %42 = tpu.matmul %1, %10, %cst_30 {dimension_numbers = #tpu.dot_dimension_numbers<[1], [0], [0], [1], [0, 0, 1, 1], [], []>} : vector<8x32xf32>, vector<32x128xf32>, vector<8x128xf32> -> vector<8x128xf32>
    %cst_31 = arith.constant dense<0.000000e+00> : vector<8xf32>
    %43 = vector.multi_reduction <add>, %7, %cst_31 [1] : vector<8x8xf32> to vector<8xf32>
    %44 = vector.shape_cast %43 : vector<8xf32> to vector<8x1xf32>
    %cst_32 = arith.constant 1.000000e-10 : f32
    %45 = vector.broadcast %cst_32 : f32 to vector<8x1xf32>
    %46 = arith.addf %44, %45 : vector<8x1xf32>
    %47 = tpu.reciprocal %46 {approx = true} : vector<8x1xf32> -> vector<8x1xf32>
    %48 = vector.broadcast %47 : vector<8x1xf32> to vector<8x8xf32>
    %49 = arith.mulf %7, %48 : vector<8x8xf32>
    %cst_33 = arith.constant dense<0.000000e+00> : vector<8x128xf32>
    %50 = tpu.matmul %49, %42, %cst_33 {dimension_numbers = #tpu.dot_dimension_numbers<[1], [0], [0], [1], [0, 0, 1, 1], [], []>} : vector<8x8xf32>, vector<8x128xf32>, vector<8x128xf32> -> vector<8x128xf32>
    %cst_34 = arith.constant dense<0.000000e+00> : vector<8x128xf32>
    %51 = tpu.matmul %3, %10, %cst_34 {dimension_numbers = #tpu.dot_dimension_numbers<[1], [0], [0], [1], [0, 0, 1, 1], [], []>} : vector<8x32xf32>, vector<32x128xf32>, vector<8x128xf32> -> vector<8x128xf32>
    %52 = arith.addf %41, %50 : vector<8x128xf32>
    %53 = arith.addf %52, %51 : vector<8x128xf32>
    %cst_35 = arith.constant 0.000000e+00 : f32
    %54 = vector.broadcast %cst_35 : f32 to vector<8x128xf32>
    %55 = arith.cmpf ogt, %53, %54 : vector<8x128xf32>
    %cst_36 = arith.constant 0.000000e+00 : f32
    %56 = vector.broadcast %cst_36 : f32 to vector<8x128xf32>
    %57 = arith.minimumf %53, %56 : vector<8x128xf32>
    %58 = math.exp %57 : vector<8x128xf32>
    %cst_37 = arith.constant 1.000000e+00 : f32
    %59 = vector.broadcast %cst_37 : f32 to vector<8x128xf32>
    %60 = arith.subf %58, %59 : vector<8x128xf32>
    %cst_38 = arith.constant 1.67326319 : f32
    %61 = vector.broadcast %cst_38 : f32 to vector<8x128xf32>
    %62 = arith.mulf %61, %60 : vector<8x128xf32>
    %63 = arith.select %55, %53, %62 : vector<8x128xi1>, vector<8x128xf32>
    %cst_39 = arith.constant 1.05070102 : f32
    %64 = vector.broadcast %cst_39 : f32 to vector<8x128xf32>
    %65 = arith.mulf %64, %63 : vector<8x128xf32>
    %c0_40 = arith.constant 0 : index
    %c0_41 = arith.constant 0 : index
    %c0_42 = arith.constant 0 : index
    %66 = vector.load %arg10[%c0_40, %c0_41, %c0_42] : memref<1x8x128xf32, #tpu.memory_space<vmem>>, vector<1x8x128xf32>
    %67 = vector.shape_cast %66 : vector<1x8x128xf32> to vector<8x128xf32>
    %68 = vector.shape_cast %65 : vector<8x128xf32> to vector<1x8x128xf32>
    tpu.vector_store %arg10[%c0_40, %c0_41, %c0_42], %68 {strides = array<i32>} : memref<1x8x128xf32, #tpu.memory_space<vmem>>, vector<1x8x128xf32>,
    return
  }
  func.func @transform_0(%arg0: i32, %arg1: i32) -> (i32, i32, i32) {
    %c0_i32 = arith.constant 0 : i32
    %c0_i32_0 = arith.constant 0 : i32
    %c0_i32_1 = arith.constant 0 : i32
    return %arg0, %c0_i32, %c0_i32_0 : i32, i32, i32
  }
  func.func @transform_1(%arg0: i32, %arg1: i32) -> (i32, i32, i32) {
    %c0_i32 = arith.constant 0 : i32
    %c0_i32_0 = arith.constant 0 : i32
    return %arg0, %arg1, %c0_i32 : i32, i32, i32
  }
  func.func @transform_2(%arg0: i32, %arg1: i32) -> (i32, i32, i32, i32) {
    %c0_i32 = arith.constant 0 : i32
    %c0_i32_0 = arith.constant 0 : i32
    %c0_i32_1 = arith.constant 0 : i32
    return %arg0, %c0_i32, %arg1, %c0_i32_0 : i32, i32, i32, i32
  }
  func.func @transform_3(%arg0: i32, %arg1: i32) -> (i32, i32, i32) {
    %c0_i32 = arith.constant 0 : i32
    %c0_i32_0 = arith.constant 0 : i32
    return %arg0, %arg1, %c0_i32 : i32, i32, i32
  }
  func.func @transform_4(%arg0: i32, %arg1: i32) -> (i32, i32, i32) {
    %c0_i32 = arith.constant 0 : i32
    %c0_i32_0 = arith.constant 0 : i32
    return %arg0, %arg1, %c0_i32 : i32, i32, i32
  }
  func.func @transform_5(%arg0: i32, %arg1: i32) -> (i32, i32) {
    %c0_i32 = arith.constant 0 : i32
    %c0_i32_0 = arith.constant 0 : i32
    %c0_i32_1 = arith.constant 0 : i32
    return %c0_i32, %c0_i32_0 : i32, i32
  }
  func.func @transform_6(%arg0: i32, %arg1: i32) -> (i32, i32) {
    %c0_i32 = arith.constant 0 : i32
    %c0_i32_0 = arith.constant 0 : i32
    %c0_i32_1 = arith.constant 0 : i32
    return %c0_i32, %c0_i32_0 : i32, i32
  }
  func.func @transform_7(%arg0: i32, %arg1: i32) -> (i32, i32) {
    %c0_i32 = arith.constant 0 : i32
    %c0_i32_0 = arith.constant 0 : i32
    %c0_i32_1 = arith.constant 0 : i32
    return %c0_i32, %c0_i32_0 : i32, i32
  }
  func.func @transform_8(%arg0: i32, %arg1: i32) -> (i32, i32, i32) {
    %c0_i32 = arith.constant 0 : i32
    %c0_i32_0 = arith.constant 0 : i32
    return %arg0, %arg1, %c0_i32 : i32, i32, i32
  }
}

</mosaic_0001>

<llo_original>
// kernel: tpu_custom_call.1
$region0: #{tpu_custom_call.1}
  #allocation0 [shape = 'u32[]', space=smem, size = 0x4, offset = 0x4, fixed_abs, tag = 'smem constant byte address 0x4 - core index']
  #allocation1 [shape = 'u32[144,128]{1,0:T(1,128)}', space=vmem, size = 0x12000, scoped, tag = 'internal scratch']
  %s0 = inlined_call_operand.vmem [shape: f32[2,8,32], index: 0, kind: input, shape index: {}]
  %s1 = inlined_call_operand.vmem [shape: f32[2,8,32], index: 1, kind: input, shape index: {}]
  %s2 = inlined_call_operand.vmem [shape: bf16[2,8,8,32], index: 2, kind: input, shape index: {}]
  %s3 = inlined_call_operand.hbm [shape: f32[2,8,8], index: 3, kind: input, shape index: {}]
  %s4 = inlined_call_operand.hbm [shape: f32[2,8,8], index: 4, kind: input, shape index: {}]
  %s5 = inlined_call_operand.vmem [shape: f32[32,128], index: 5, kind: input, shape index: {}]
  %s6 = inlined_call_operand.vmem [shape: f32[128,32], index: 6, kind: input, shape index: {}]
  %s7 = inlined_call_operand.vmem [shape: f32[32,128], index: 7, kind: input, shape index: {}]
  %s8 = inlined_call_operand.hbm [shape: f32[2,8,128], index: 8, kind: output, shape index: {}]
  %s9 = sld [smem:[#allocation0]]
  $region73: #{tpu_custom_call.1} parent=0
    _
  %s11 = ssub.s32 1, %s9
  %s12 = scalar_select 0, %s11, %s9
  $region1: #{tpu_custom_call.1} parent=0
    #allocation2 [shape = 'u8[8192]{0}', space=vmem, size = 0x2000, scoped, tag = 'input window, operand 3']
    #allocation3 [shape = 's32[2]{0}', space=sflag, size = 0x8, scoped, tag = 'scoped memory for tpu_custom_call.1']
    #allocation4 [shape = 's32[2]{0}', space=sflag, size = 0x8, scoped, tag = 'scoped memory for tpu_custom_call.1']
    #allocation5 [shape = 'u8[8192]{0}', space=vmem, size = 0x2000, scoped, tag = 'input window, operand 4']
    #allocation6 [shape = 's32[2]{0}', space=sflag, size = 0x8, scoped, tag = 'scoped memory for tpu_custom_call.1']
    #allocation7 [shape = 'u8[8192]{0}', space=vmem, size = 0x2000, scoped, tag = 'output window, operand 0']
    %13 = vsyncpa [#allocation3], 0
    %s14 = scalar_lea.sflag [#allocation3], 1
    %15 = vsyncpa %s14, 0
    %16 = vsyncpa [#allocation6], 0
    %s17 = scalar_lea.sflag [#allocation6], 1
    %18 = vsyncpa %s17, 0
    %19 = vsyncpa [#allocation4], 0
    %s20 = scalar_lea.sflag [#allocation4], 1
    %21 = vsyncpa %s20, 0
    loop: start=0, step=1, limit=4
    $region2: #{tpu_custom_call.1} parent=1 // loop_pre_header
      _
    $region3: #{tpu_custom_call.1} parent=1 // loop_header
      %s23 = sphi 0, %s27
      %p24 = scmp.ge.s32.totalorder %s23, 4
      %s30 = sphi 0, %s42
      %s31 = sphi 0, %s38
      %s32 = sphi 0, %s30
      %s33 = sphi 0, %s31
      %s34 = sphi 0, %s32
      %s35 = sphi 0, %s33
      %s45 = sphi 0, %s47
      %s48 = sphi 0, %s45
      %s49 = sphi 0, %s48
      %s65 = sphi 0, %s49
      %s73 = sphi 0, %s75
      %s76 = sphi 0, %s73
      %s77 = sphi 0, %s76
      %s93 = sphi 0, %s77
      %s101 = sphi 0, %s103
      %s104 = sphi 0, %s101
      %s105 = sphi 0, %s104
      %s121 = sphi 0, %s105
      %s129 = sphi 0, %s131
      %s132 = sphi 0, %s129
      %s133 = sphi 0, %s132
      %s149 = sphi 0, %s133
      %s157 = sphi 0, %s159
      %s160 = sphi 0, %s157
      %s161 = sphi 0, %s160
      %s177 = sphi 0, %s161
      %s181 = sphi 0, %s181
      %s183 = sphi 0, %s181
      %s184 = sphi 0, %s183
      %s198 = sphi 0, %s184
      %s202 = sphi 0, %s202
      %s204 = sphi 0, %s202
      %s205 = sphi 0, %s204
      %s219 = sphi 0, %s205
      %s223 = sphi 0, %s223
      %s225 = sphi 0, %s223
      %s226 = sphi 0, %s225
      %s240 = sphi 0, %s226
      %s248 = sphi 0, %s250
      %s251 = sphi 0, %s248
      %s252 = sphi 0, %s251
      %s268 = sphi 0, %s252
    $region4: #{tpu_custom_call.1} parent=1 // loop_header_branch
      %26 = sbr.rel (%p24) target = $region8
    $region5: #{tpu_custom_call.1} parent=1 // loop_body
      %s28 = ssub.s32 %s23, 1
      %s29 = ssub.s32 %s23, 2
      %s36 = sadd.s32 1, %s31
      %p37 = scmp.ge.s32.totalorder %s36, 1
      %s38 = scalar_select %p37, 0, %s36
      %s39 = sadd.s32 1, %s30
      %s40 = scalar_select %p37, %s39, %s30
      %p41 = scmp.ge.s32.totalorder %s40, 2
      %s42 = scalar_select %p41, 0, %s40
      %s43 = ssub.s32 %s30, %s42
      %p44 = scmp.eq.s32.totalorder %s43, 0
      %s46 = sadd.s32 %s45, 1
      %s47 = scalar_select %p44, %s45, %s46
      %p50 = pneg %p44
      %p51 = scmp.eq.s32.totalorder %s23, 1
      %p52 = por %p50, %p51
      %p53 = scmp.ne.s32.totalorder %s45, %s48
      %p54 = scmp.eq.s32.totalorder %s23, 0
      %p55 = por %p53, %p54
      %p56 = scmp.ne.s32.totalorder %s45, %s48
      %p57 = scmp.eq.s32.totalorder %s28, 1
      %p58 = por %p56, %p57
      %p59 = scmp.ne.s32.totalorder %s48, %s49
      %p60 = scmp.eq.s32.totalorder %s28, 0
      %p61 = por %p59, %p60
      %p62 = scmp.ne.s32.totalorder %s48, %s49
      %p63 = scmp.eq.s32.totalorder %s29, 1
      %p64 = por %p62, %p63
      %p66 = scmp.ne.s32.totalorder %s49, %s65
      %p67 = scmp.eq.s32.totalorder %s29, 0
      %p68 = por %p66, %p67
      %s69 = ssub.s32 %s30, %s42
      %s70 = ssub.s32 %s31, %s38
      %s71 = sor.u32 %s69, %s70
      %p72 = scmp.eq.s32.totalorder %s71, 0
      %s74 = sadd.s32 %s73, 1
      %s75 = scalar_select %p72, %s73, %s74
      %p78 = pneg %p72
      %p79 = scmp.eq.s32.totalorder %s23, 1
      %p80 = por %p78, %p79
      %p81 = scmp.ne.s32.totalorder %s73, %s76
      %p82 = scmp.eq.s32.totalorder %s23, 0
      %p83 = por %p81, %p82
      %p84 = scmp.ne.s32.totalorder %s73, %s76
      %p85 = scmp.eq.s32.totalorder %s28, 1
      %p86 = por %p84, %p85
      %p87 = scmp.ne.s32.totalorder %s76, %s77
      %p88 = scmp.eq.s32.totalorder %s28, 0
      %p89 = por %p87, %p88
      %p90 = scmp.ne.s32.totalorder %s76, %s77
      %p91 = scmp.eq.s32.totalorder %s29, 1
      %p92 = por %p90, %p91
      %p94 = scmp.ne.s32.totalorder %s77, %s93
      %p95 = scmp.eq.s32.totalorder %s29, 0
      %p96 = por %p94, %p95
      %s97 = ssub.s32 %s30, %s42
      %s98 = ssub.s32 %s31, %s38
      %s99 = sor.u32 %s97, %s98
      %p100 = scmp.eq.s32.totalorder %s99, 0
      %s102 = sadd.s32 %s101, 1
      %s103 = scalar_select %p100, %s101, %s102
      %p106 = pneg %p100
      %p107 = scmp.eq.s32.totalorder %s23, 1
      %p108 = por %p106, %p107
      %p109 = scmp.ne.s32.totalorder %s101, %s104
      %p110 = scmp.eq.s32.totalorder %s23, 0
      %p111 = por %p109, %p110
      %p112 = scmp.ne.s32.totalorder %s101, %s104
      %p113 = scmp.eq.s32.totalorder %s28, 1
      %p114 = por %p112, %p113
      %p115 = scmp.ne.s32.totalorder %s104, %s105
      %p116 = scmp.eq.s32.totalorder %s28, 0
      %p117 = por %p115, %p116
      %p118 = scmp.ne.s32.totalorder %s104, %s105
      %p119 = scmp.eq.s32.totalorder %s29, 1
      %p120 = por %p118, %p119
      %p122 = scmp.ne.s32.totalorder %s105, %s121
      %p123 = scmp.eq.s32.totalorder %s29, 0
      %p124 = por %p122, %p123
      %s125 = ssub.s32 %s30, %s42
      %s126 = ssub.s32 %s31, %s38
      %s127 = sor.u32 %s125, %s126
      %p128 = scmp.eq.s32.totalorder %s127, 0
      %s130 = sadd.s32 %s129, 1
      %s131 = scalar_select %p128, %s129, %s130
      %p134 = pneg %p128
      %p135 = scmp.eq.s32.totalorder %s23, 1
      %p136 = por %p134, %p135
      %p137 = scmp.ne.s32.totalorder %s129, %s132
      %p138 = scmp.eq.s32.totalorder %s23, 0
      %p139 = por %p137, %p138
      %p140 = scmp.ne.s32.totalorder %s129, %s132
      %p141 = scmp.eq.s32.totalorder %s28, 1
      %p142 = por %p140, %p141
      %p143 = scmp.ne.s32.totalorder %s132, %s133
      %p144 = scmp.eq.s32.totalorder %s28, 0
      %p145 = por %p143, %p144
      %p146 = scmp.ne.s32.totalorder %s132, %s133
      %p147 = scmp.eq.s32.totalorder %s29, 1
      %p148 = por %p146, %p147
      %p150 = scmp.ne.s32.totalorder %s133, %s149
      %p151 = scmp.eq.s32.totalorder %s29, 0
      %p152 = por %p150, %p151
      %s153 = ssub.s32 %s30, %s42
      %s154 = ssub.s32 %s31, %s38
      %s155 = sor.u32 %s153, %s154
      %p156 = scmp.eq.s32.totalorder %s155, 0
      %s158 = sadd.s32 %s157, 1
      %s159 = scalar_select %p156, %s157, %s158
      %p162 = pneg %p156
      %p163 = scmp.eq.s32.totalorder %s23, 1
      %p164 = por %p162, %p163
      %p165 = scmp.ne.s32.totalorder %s157, %s160
      %p166 = scmp.eq.s32.totalorder %s23, 0
      %p167 = por %p165, %p166
      %p168 = scmp.ne.s32.totalorder %s157, %s160
      %p169 = scmp.eq.s32.totalorder %s28, 1
      %p170 = por %p168, %p169
      %p171 = scmp.ne.s32.totalorder %s160, %s161
      %p172 = scmp.eq.s32.totalorder %s28, 0
      %p173 = por %p171, %p172
      %p174 = scmp.ne.s32.totalorder %s160, %s161
      %p175 = scmp.eq.s32.totalorder %s29, 1
      %p176 = por %p174, %p175
      %p178 = scmp.ne.s32.totalorder %s161, %s177
      %p179 = scmp.eq.s32.totalorder %s29, 0
      %p180 = por %p178, %p179
      %s182 = sadd.s32 %s181, 1
      %p185 = scmp.eq.s32.totalorder %s23, 1
      %p186 = scmp.ne.s32.totalorder %s181, %s183
      %p187 = scmp.eq.s32.totalorder %s23, 0
      %p188 = por %p186, %p187
      %p189 = scmp.ne.s32.totalorder %s181, %s183
      %p190 = scmp.eq.s32.totalorder %s28, 1
      %p191 = por %p189, %p190
      %p192 = scmp.ne.s32.totalorder %s183, %s184
      %p193 = scmp.eq.s32.totalorder %s28, 0
      %p194 = por %p192, %p193
      %p195 = scmp.ne.s32.totalorder %s183, %s184
      %p196 = scmp.eq.s32.totalorder %s29, 1
      %p197 = por %p195, %p196
      %p199 = scmp.ne.s32.totalorder %s184, %s198
      %p200 = scmp.eq.s32.totalorder %s29, 0
      %p201 = por %p199, %p200
      %s203 = sadd.s32 %s202, 1
      %p206 = scmp.eq.s32.totalorder %s23, 1
      %p207 = scmp.ne.s32.totalorder %s202, %s204
      %p208 = scmp.eq.s32.totalorder %s23, 0
      %p209 = por %p207, %p208
      %p210 = scmp.ne.s32.totalorder %s202, %s204
      %p211 = scmp.eq.s32.totalorder %s28, 1
      %p212 = por %p210, %p211
      %p213 = scmp.ne.s32.totalorder %s204, %s205
      %p214 = scmp.eq.s32.totalorder %s28, 0
      %p215 = por %p213, %p214
      %p216 = scmp.ne.s32.totalorder %s204, %s205
      %p217 = scmp.eq.s32.totalorder %s29, 1
      %p218 = por %p216, %p217
      %p220 = scmp.ne.s32.totalorder %s205, %s219
      %p221 = scmp.eq.s32.totalorder %s29, 0
      %p222 = por %p220, %p221
      %s224 = sadd.s32 %s223, 1
      %p227 = scmp.eq.s32.totalorder %s23, 1
      %p228 = scmp.ne.s32.totalorder %s223, %s225
      %p229 = scmp.eq.s32.totalorder %s23, 0
      %p230 = por %p228, %p229
      %p231 = scmp.ne.s32.totalorder %s223, %s225
      %p232 = scmp.eq.s32.totalorder %s28, 1
      %p233 = por %p231, %p232
      %p234 = scmp.ne.s32.totalorder %s225, %s226
      %p235 = scmp.eq.s32.totalorder %s28, 0
      %p236 = por %p234, %p235
      %p237 = scmp.ne.s32.totalorder %s225, %s226
      %p238 = scmp.eq.s32.totalorder %s29, 1
      %p239 = por %p237, %p238
      %p241 = scmp.ne.s32.totalorder %s226, %s240
      %p242 = scmp.eq.s32.totalorder %s29, 0
      %p243 = por %p241, %p242
      %s244 = ssub.s32 %s30, %s42
      %s245 = ssub.s32 %s31, %s38
      %s246 = sor.u32 %s244, %s245
      %p247 = scmp.eq.s32.totalorder %s246, 0
      %s249 = sadd.s32 %s248, 1
      %s250 = scalar_select %p247, %s248, %s249
      %p253 = pneg %p247
      %p254 = scmp.eq.s32.totalorder %s23, 1
      %p255 = por %p253, %p254
      %p256 = scmp.ne.s32.totalorder %s248, %s251
      %p257 = scmp.eq.s32.totalorder %s23, 0
      %p258 = por %p256, %p257
      %p259 = scmp.ne.s32.totalorder %s248, %s251
      %p260 = scmp.eq.s32.totalorder %s28, 1
      %p261 = por %p259, %p260
      %p262 = scmp.ne.s32.totalorder %s251, %s252
      %p263 = scmp.eq.s32.totalorder %s28, 0
      %p264 = por %p262, %p263
      %p265 = scmp.ne.s32.totalorder %s251, %s252
      %p266 = scmp.eq.s32.totalorder %s29, 1
      %p267 = por %p265, %p266
      %p269 = scmp.ne.s32.totalorder %s252, %s268
      %p270 = scmp.eq.s32.totalorder %s29, 0
      %p271 = por %p269, %p270
      %p272 = scmp.le.s32.totalorder 1, %s23
      %p273 = scmp.lt.s32.totalorder %s23, 3
      %p274 = pnand %p272, %p273
      %p275 = pneg %p274
      // Predicated region
      $region9: #{tpu_custom_call.1} parent=5 // pred_check
        _
      $region10: #{tpu_custom_call.1} parent=5 // pred_check_branch
        %277 = sbr.rel (%p274) target = $region12
      $region11: #{tpu_custom_call.1} parent=5 // pred_region
        %s278 = ssub.s32 %s23, 1
        // Predicated region
        $region13: #{tpu_custom_call.1} parent=11 // pred_check
          %p279 = pneg %p194
        $region14: #{tpu_custom_call.1} parent=11 // pred_check_branch
          %281 = sbr.rel (%p279) target = $region16
        $region15: #{tpu_custom_call.1} parent=11 // pred_region
          _
        $region16: #{tpu_custom_call.1} parent=11 // pred_fallthru
          _
        // Predicated region
        $region17: #{tpu_custom_call.1} parent=11 // pred_check
          %p282 = pneg %p215
        $region18: #{tpu_custom_call.1} parent=11 // pred_check_branch
          %284 = sbr.rel (%p282) target = $region20
        $region19: #{tpu_custom_call.1} parent=11 // pred_region
          _
        $region20: #{tpu_custom_call.1} parent=11 // pred_fallthru
          _
        // Predicated region
        $region21: #{tpu_custom_call.1} parent=11 // pred_check
          %p285 = pneg %p236
        $region22: #{tpu_custom_call.1} parent=11 // pred_check_branch
          %287 = sbr.rel (%p285) target = $region24
        $region23: #{tpu_custom_call.1} parent=11 // pred_region
          _
        $region24: #{tpu_custom_call.1} parent=11 // pred_fallthru
          _
      $region12: #{tpu_custom_call.1} parent=5 // pred_fallthru
        _
      %p288 = scmp.lt.s32.totalorder %s23, 2
      // Predicated region
      $region25: #{tpu_custom_call.1} parent=5 // pred_check
        %p289 = pneg %p288
      $region26: #{tpu_custom_call.1} parent=5 // pred_check_branch
        %291 = sbr.rel (%p289) target = $region28
      $region27: #{tpu_custom_call.1} parent=5 // pred_region
        // Predicated region
        $region29: #{tpu_custom_call.1} parent=27 // pred_check
          %p292 = pneg %p55
        $region30: #{tpu_custom_call.1} parent=27 // pred_check_branch
          %294 = sbr.rel (%p292) target = $region32
        $region31: #{tpu_custom_call.1} parent=27 // pred_region
          %p295 = scmp.lt.s32.totalorder %s30, 1
          %s296 = scalar_select %p295, %s30, 1
          %s297 = smul.addr %s296, 8
          %s298 = scalar_lea.vmem %s0, %s297
        $region32: #{tpu_custom_call.1} parent=27 // pred_fallthru
          _
        // Predicated region
        $region33: #{tpu_custom_call.1} parent=27 // pred_check
          %p299 = pneg %p83
        $region34: #{tpu_custom_call.1} parent=27 // pred_check_branch
          %301 = sbr.rel (%p299) target = $region36
        $region35: #{tpu_custom_call.1} parent=27 // pred_region
          %p302 = scmp.lt.s32.totalorder %s30, 1
          %s303 = scalar_select %p302, %s30, 1
          %p304 = scmp.lt.s32.totalorder %s31, 0
          %s305 = scalar_select %p304, %s31, 0
          %s306 = sadd.s32 %s305, %s303
          %s307 = smul.addr %s306, 8
          %s308 = scalar_lea.vmem %s1, %s307
        $region36: #{tpu_custom_call.1} parent=27 // pred_fallthru
          _
        // Predicated region
        $region37: #{tpu_custom_call.1} parent=27 // pred_check
          %p309 = pneg %p111
        $region38: #{tpu_custom_call.1} parent=27 // pred_check_branch
          %311 = sbr.rel (%p309) target = $region40
        $region39: #{tpu_custom_call.1} parent=27 // pred_region
          %p312 = scmp.lt.s32.totalorder %s30, 1
          %s313 = scalar_select %p312, %s30, 1
          %p314 = scmp.lt.s32.totalorder %s31, 0
          %s315 = scalar_select %p314, %s31, 0
          %s316 = smul.addr %s313, 8
          %s317 = sadd.s32 %s315, %s316
          %s318 = smul.addr %s317, 4
          %s319 = scalar_lea.vmem %s2, %s318
        $region40: #{tpu_custom_call.1} parent=27 // pred_fallthru
          _
        // Predicated region
        $region41: #{tpu_custom_call.1} parent=27 // pred_check
          %p320 = pneg %p139
        $region42: #{tpu_custom_call.1} parent=27 // pred_check_branch
          %322 = sbr.rel (%p320) target = $region44
        $region43: #{tpu_custom_call.1} parent=27 // pred_region
          %s323 = sand.u32 %s129, 1
          %s324 = scalar_lea.sflag [#allocation3], %s323
          %s325 = sand.u32 %s129, 1
          %s326 = smul.addr %s325, 8
          %s327 = scalar_lea.vmem [#allocation2], %s326
          %s329 = ssub.s32 128, 128
          %330 = vsyncadd %s324, %s329
          %s331 = sadd.s32 %s31, %s30
          %s332 = smul.addr %s331, 128
          %s333 = scalar_lea.hbm %s3, %s332
          %s335 = sshll.u32 %s327, 4
          %s336 = int_to_ptr.vmem [resolvable:$true] %s335
          %338 = dma.hbm_to_vmem [thread:$0]  %s333, 128, %s336, %s324
        $region44: #{tpu_custom_call.1} parent=27 // pred_fallthru
          _
        // Predicated region
        $region45: #{tpu_custom_call.1} parent=27 // pred_check
          %p339 = pneg %p167
        $region46: #{tpu_custom_call.1} parent=27 // pred_check_branch
          %341 = sbr.rel (%p339) target = $region48
        $region47: #{tpu_custom_call.1} parent=27 // pred_region
          %s342 = sand.u32 %s157, 1
          %s343 = scalar_lea.sflag [#allocation6], %s342
          %s344 = sand.u32 %s157, 1
          %s345 = smul.addr %s344, 8
          %s346 = scalar_lea.vmem [#allocation5], %s345
          %s348 = ssub.s32 128, 128
          %349 = vsyncadd %s343, %s348
          %s350 = sadd.s32 %s31, %s30
          %s351 = smul.addr %s350, 128
          %s352 = scalar_lea.hbm %s4, %s351
          %s354 = sshll.u32 %s346, 4
          %s355 = int_to_ptr.vmem [resolvable:$true] %s354
          %357 = dma.hbm_to_vmem [thread:$0]  %s352, 128, %s355, %s343
        $region48: #{tpu_custom_call.1} parent=27 // pred_fallthru
          _
      $region28: #{tpu_custom_call.1} parent=5 // pred_fallthru
        _
      %p358 = scmp.le.s32.totalorder 1, %s23
      %p359 = scmp.lt.s32.totalorder %s23, 3
      %p360 = pnand %p358, %p359
      %p361 = pneg %p360
      // Predicated region
      $region49: #{tpu_custom_call.1} parent=5 // pred_check
        _
      $region50: #{tpu_custom_call.1} parent=5 // pred_check_branch
        %363 = sbr.rel (%p360) target = $region52
      $region51: #{tpu_custom_call.1} parent=5 // pred_region
        %s364 = ssub.s32 %s23, 1
        %s365 = sand.u32 %s132, 1
        %s366 = scalar_lea.sflag [#allocation3], %s365
        %s367 = sand.u32 %s132, 1
        %s368 = smul.addr %s367, 8
        %s369 = scalar_lea.vmem [#allocation2], %s368
        // Predicated region
        $region53: #{tpu_custom_call.1} parent=51 // pred_check
          %p370 = pneg %p145
        $region54: #{tpu_custom_call.1} parent=51 // pred_check_branch
          %372 = sbr.rel (%p370) target = $region56
        $region55: #{tpu_custom_call.1} parent=51 // pred_region
          %373 = dma.done %s366, 128
        $region56: #{tpu_custom_call.1} parent=51 // pred_fallthru
          _
        %s374 = sand.u32 %s160, 1
        %s375 = scalar_lea.sflag [#allocation6], %s374
        %s376 = sand.u32 %s160, 1
        %s377 = smul.addr %s376, 8
        %s378 = scalar_lea.vmem [#allocation5], %s377
        // Predicated region
        $region57: #{tpu_custom_call.1} parent=51 // pred_check
          %p379 = pneg %p173
        $region58: #{tpu_custom_call.1} parent=51 // pred_check_branch
          %381 = sbr.rel (%p379) target = $region60
        $region59: #{tpu_custom_call.1} parent=51 // pred_region
          %382 = dma.done %s375, 128
        $region60: #{tpu_custom_call.1} parent=51 // pred_fallthru
          _
        %p383 = scmp.lt.s32.totalorder %s32, 1
        %s384 = scalar_select %p383, %s32, 1
        %s385 = smul.addr %s384, 8
        %s386 = scalar_lea.vmem %s0, %s385
        %p387 = pneg %p61
        %p388 = pneg %p58
        %p389 = scmp.lt.s32.totalorder %s32, 1
        %s390 = scalar_select %p389, %s32, 1
        %p391 = scmp.lt.s32.totalorder %s33, 0
        %s392 = scalar_select %p391, %s33, 0
        %s393 = sadd.s32 %s392, %s390
        %s394 = smul.addr %s393, 8
        %s395 = scalar_lea.vmem %s1, %s394
        %p396 = pneg %p89
        %p397 = pneg %p86
        %p398 = scmp.lt.s32.totalorder %s32, 1
        %s399 = scalar_select %p398, %s32, 1
        %p400 = scmp.lt.s32.totalorder %s33, 0
        %s401 = scalar_select %p400, %s33, 0
        %s402 = smul.addr %s399, 8
        %s403 = sadd.s32 %s401, %s402
        %s404 = smul.addr %s403, 4
        %s405 = scalar_lea.vmem %s2, %s404
        %p406 = pneg %p117
        %p407 = pneg %p114
        %s408 = sand.u32 %s132, 1
        %s409 = scalar_lea.sflag [#allocation3], %s408
        %s410 = sand.u32 %s132, 1
        %s411 = smul.addr %s410, 8
        %s412 = scalar_lea.vmem [#allocation2], %s411
        %p413 = pneg %p145
        %p414 = pneg %p142
        %s415 = sand.u32 %s160, 1
        %s416 = scalar_lea.sflag [#allocation6], %s415
        %s417 = sand.u32 %s160, 1
        %s418 = smul.addr %s417, 8
        %s419 = scalar_lea.vmem [#allocation5], %s418
        %p420 = pneg %p173
        %p421 = pneg %p170
        %p422 = pneg %p194
        %p423 = pneg %p191
        %p424 = pneg %p215
        %p425 = pneg %p212
        %p426 = pneg %p236
        %p427 = pneg %p233
        %p428 = pneg %p264
        %p429 = pneg %p261
        %s430 = sand.u32 %s251, 1
        %s431 = scalar_lea.sflag [#allocation4], %s430
        %s432 = sand.u32 %s251, 1
        %s433 = smul.addr %s432, 8
        %s434 = scalar_lea.vmem [#allocation7], %s433
        %p435 = scmp.lt.s32.totalorder %s32, 1
        %s436 = scalar_select %p435, %s32, 1
        %s437 = smul.addr %s436, 8
        %s438 = scalar_lea.vmem %s0, %s437
        %p439 = scmp.lt.s32.totalorder %s32, 1
        %s440 = scalar_select %p439, %s32, 1
        %p441 = scmp.lt.s32.totalorder %s33, 0
        %s442 = scalar_select %p441, %s33, 0
        %s443 = sadd.s32 %s442, %s440
        %s444 = smul.addr %s443, 8
        %s445 = scalar_lea.vmem %s1, %s444
        %p446 = scmp.lt.s32.totalorder %s32, 1
        %s447 = scalar_select %p446, %s32, 1
        %p448 = scmp.lt.s32.totalorder %s33, 0
        %s449 = scalar_select %p448, %s33, 0
        %s450 = smul.addr %s447, 8
        %s451 = sadd.s32 %s449, %s450
        %s452 = smul.addr %s451, 4
        %s453 = scalar_lea.vmem %s2, %s452
        %v454 = vld [vmem:[%s438] sm:$0xff]
        %v455 = vld [vmem:[%s445] sm:$0xff]
        %v456 = vld [vmem:[%s369] sm:$0xff]
        %v457 = vld [vmem:[%s378] sm:$0xff]
        %v458 = vld [vmem:[%s5] sm:$0xff]
        %v459 = vld [vmem:[%s5 + $0x8] sm:$0xff]
        %v460 = vld [vmem:[%s5 + $0x10] sm:$0xff]
        %v461 = vld [vmem:[%s5 + $0x18] sm:$0xff]
        %v462 = vld [vmem:[%s6] sm:$0xff]
        %v463 = vld [vmem:[%s6 + $0x8] sm:$0xff]
        %v464 = vld [vmem:[%s6 + $0x10] sm:$0xff]
        %v465 = vld [vmem:[%s6 + $0x18] sm:$0xff]
        %v466 = vld [vmem:[%s6 + $0x20] sm:$0xff]
        %v467 = vld [vmem:[%s6 + $0x28] sm:$0xff]
        %v468 = vld [vmem:[%s6 + $0x30] sm:$0xff]
        %v469 = vld [vmem:[%s6 + $0x38] sm:$0xff]
        %v470 = vld [vmem:[%s6 + $0x40] sm:$0xff]
        %v471 = vld [vmem:[%s6 + $0x48] sm:$0xff]
        %v472 = vld [vmem:[%s6 + $0x50] sm:$0xff]
        %v473 = vld [vmem:[%s6 + $0x58] sm:$0xff]
        %v474 = vld [vmem:[%s6 + $0x60] sm:$0xff]
        %v475 = vld [vmem:[%s6 + $0x68] sm:$0xff]
        %v476 = vld [vmem:[%s6 + $0x70] sm:$0xff]
        %v477 = vld [vmem:[%s6 + $0x78] sm:$0xff]
        %v478 = vld [vmem:[%s7] sm:$0xff]
        %v479 = vld [vmem:[%s7 + $0x8] sm:$0xff]
        %v480 = vld [vmem:[%s7 + $0x10] sm:$0xff]
        %v481 = vld [vmem:[%s7 + $0x18] sm:$0xff]
        %vm482 = vcmask 261120
        %v484 = vsel %vm482, %v454, 0
        %486 = vmatprep.subr.mxu0 0.0
        %487 = vmatpush1.msra.mxu0 0.0
        %488 = vmatprep.subr.mxu0 0.0
        %489 = vmatpush1.msra.mxu0 0.0
        %490 = vmatprep.subr.mxu0 0.0
        %491 = vmatpush1.msra.mxu0 0.0
        %492 = vmatprep.subr.mxu0 0.0
        %493 = vmatpush1.msra.mxu0 0.0
        %494 = vmatprep.subr.mxu0 0.0
        %495 = vmatpush1.msra.mxu0 0.0
        %496 = vmatprep.subr.mxu0 0.0
        %497 = vmatpush1.msra.mxu0 0.0
        %498 = vmatprep.subr.mxu0 0.0
        %499 = vmatpush1.msra.mxu0 0.0
        %500 = vmatprep.subr.mxu0 0.0
        %501 = vmatpush1.msra.mxu0 0.0
        %502 = vmatprep.subr.mxu0 0.0
        %503 = vmatpush1.msra.mxu0 0.0
        %504 = vmatprep.subr.mxu0 0.0
        %505 = vmatpush1.msra.mxu0 0.0
        %506 = vmatprep.subr.mxu0 0.0
        %507 = vmatpush1.msra.mxu0 0.0
        %508 = vmatprep.subr.mxu0 0.0
        %509 = vmatpush1.msra.mxu0 0.0
        %510 = vmatprep.subr.mxu0 0.0
        %511 = vmatpush1.msra.mxu0 %v461
        %512 = vmatprep.subr.mxu0 0.0
        %513 = vmatpush1.msra.mxu0 %v460
        %514 = vmatprep.subr.mxu0 0.0
        %515 = vmatpush1.msra.mxu0 %v459
        %516 = vmatprep.subr.mxu0 0.0
        %517 = vmatpush1.msra.mxu0 %v458
        %518 = vmatprep.subr.mxu0 0.0
        %519 = vmatpush2.msra.mxu0 0.0
        %520 = vmatprep.subr.mxu0 0.0
        %521 = vmatpush2.msra.mxu0 0.0
        %522 = vmatprep.subr.mxu0 0.0
        %523 = vmatpush2.msra.mxu0 0.0
        %524 = vmatprep.subr.mxu0 0.0
        %525 = vmatpush2.msra.mxu0 0.0
        %526 = vmatprep.subr.mxu0 0.0
        %527 = vmatpush2.msra.mxu0 0.0
        %528 = vmatprep.subr.mxu0 0.0
        %529 = vmatpush2.msra.mxu0 0.0
        %530 = vmatprep.subr.mxu0 0.0
        %531 = vmatpush2.msra.mxu0 0.0
        %532 = vmatprep.subr.mxu0 0.0
        %533 = vmatpush2.msra.mxu0 0.0
        %534 = vmatprep.subr.mxu0 0.0
        %535 = vmatpush2.msra.mxu0 0.0
        %536 = vmatprep.subr.mxu0 0.0
        %537 = vmatpush2.msra.mxu0 0.0
        %538 = vmatprep.subr.mxu0 0.0
        %539 = vmatpush2.msra.mxu0 0.0
        %540 = vmatprep.subr.mxu0 0.0
        %541 = vmatpush2.msra.mxu0 0.0
        %542 = vmatprep.subr.mxu0 0.0
        %543 = vmatpush2.msra.mxu0 0.0
        %544 = vmatprep.subr.mxu0 0.0
        %545 = vmatpush2.msra.mxu0 0.0
        %546 = vmatprep.subr.mxu0 0.0
        %547 = vmatpush2.msra.mxu0 0.0
        %548 = vmatprep.subr.mxu0 0.0
        %549 = vmatpush2.msra.mxu0 0.0
        %550 = vmatprep.mubr.f32.mxu0 0.0
        %551 = vmatmul.mubr.f32.gmra.mxu0 %v484
        %v552 = vpop.f32.mrf.mxu0
        %v553 = vadd.f32 0.0, %v552
        %v554 = vpop.f32.mrf.mxu0
        %555 = vdwg.mxu0
        %556 = vmatprep.subr.mxu0 0.0
        %557 = vmatpush1.msra.mxu0 %v477
        %558 = vmatprep.subr.mxu0 0.0
        %559 = vmatpush1.msra.mxu0 %v476
        %560 = vmatprep.subr.mxu0 0.0
        %561 = vmatpush1.msra.mxu0 %v475
        %562 = vmatprep.subr.mxu0 0.0
        %563 = vmatpush1.msra.mxu0 %v474
        %564 = vmatprep.subr.mxu0 0.0
        %565 = vmatpush1.msra.mxu0 %v473
        %566 = vmatprep.subr.mxu0 0.0
        %567 = vmatpush1.msra.mxu0 %v472
        %568 = vmatprep.subr.mxu0 0.0
        %569 = vmatpush1.msra.mxu0 %v471
        %570 = vmatprep.subr.mxu0 0.0
        %571 = vmatpush1.msra.mxu0 %v470
        %572 = vmatprep.subr.mxu0 0.0
        %573 = vmatpush1.msra.mxu0 %v469
        %574 = vmatprep.subr.mxu0 0.0
        %575 = vmatpush1.msra.mxu0 %v468
        %576 = vmatprep.subr.mxu0 0.0
        %577 = vmatpush1.msra.mxu0 %v467
        %578 = vmatprep.subr.mxu0 0.0
        %579 = vmatpush1.msra.mxu0 %v466
        %580 = vmatprep.subr.mxu0 0.0
        %581 = vmatpush1.msra.mxu0 %v465
        %582 = vmatprep.subr.mxu0 0.0
        %583 = vmatpush1.msra.mxu0 %v464
        %584 = vmatprep.subr.mxu0 0.0
        %585 = vmatpush1.msra.mxu0 %v463
        %586 = vmatprep.subr.mxu0 0.0
        %587 = vmatpush1.msra.mxu0 %v462
        %588 = vmatprep.subr.mxu0 0.0
        %589 = vmatpush2.msra.mxu0 0.0
        %590 = vmatprep.subr.mxu0 0.0
        %591 = vmatpush2.msra.mxu0 0.0
        %592 = vmatprep.subr.mxu0 0.0
        %593 = vmatpush2.msra.mxu0 0.0
        %594 = vmatprep.subr.mxu0 0.0
        %595 = vmatpush2.msra.mxu0 0.0
        %596 = vmatprep.subr.mxu0 0.0
        %597 = vmatpush2.msra.mxu0 0.0
        %598 = vmatprep.subr.mxu0 0.0
        %599 = vmatpush2.msra.mxu0 0.0
        %600 = vmatprep.subr.mxu0 0.0
        %601 = vmatpush2.msra.mxu0 0.0
        %602 = vmatprep.subr.mxu0 0.0
        %603 = vmatpush2.msra.mxu0 0.0
        %604 = vmatprep.subr.mxu0 0.0
        %605 = vmatpush2.msra.mxu0 0.0
        %606 = vmatprep.subr.mxu0 0.0
        %607 = vmatpush2.msra.mxu0 0.0
        %608 = vmatprep.subr.mxu0 0.0
        %609 = vmatpush2.msra.mxu0 0.0
        %610 = vmatprep.subr.mxu0 0.0
        %611 = vmatpush2.msra.mxu0 0.0
        %612 = vmatprep.subr.mxu0 0.0
        %613 = vmatpush2.msra.mxu0 0.0
        %614 = vmatprep.subr.mxu0 0.0
        %615 = vmatpush2.msra.mxu0 0.0
        %616 = vmatprep.subr.mxu0 0.0
        %617 = vmatpush2.msra.mxu0 0.0
        %618 = vmatprep.subr.mxu0 0.0
        %619 = vmatpush2.msra.mxu0 0.0
        %620 = vmatprep.mubr.f32.mxu0 0.0
        %621 = vmatmul.mubr.f32.gmra.mxu0 %v553
        %v622 = vpop.f32.mrf.mxu0
        %v623 = vadd.f32 0.0, %v622
        %v624 = vpop.f32.mrf.mxu0
        %625 = vdwg.mxu0
        %v626 = vld [vmem:[%s453] sm:$0xf]
        %v627 = vld [vmem:[%s453 + $0x4] sm:$0xf]
        %v628 = vld [vmem:[%s453 + $0x8] sm:$0xf]
        %v629 = vld [vmem:[%s453 + $0xc] sm:$0xf]
        %v630 = vld [vmem:[%s453 + $0x10] sm:$0xf]
        %v631 = vld [vmem:[%s453 + $0x14] sm:$0xf]
        %v632 = vld [vmem:[%s453 + $0x18] sm:$0xf]
        %v633 = vld [vmem:[%s453 + $0x1c] sm:$0xf]
        %v634 = vunpack.c.l.bf16 %v626
        %v635 = vunpack.c.l.bf16 %v627
        %v636 = vunpack.c.l.bf16 %v628
        %v637 = vunpack.c.l.bf16 %v629
        %v638 = vunpack.c.l.bf16 %v630
        %v639 = vunpack.c.l.bf16 %v631
        %v640 = vunpack.c.l.bf16 %v632
        %v641 = vunpack.c.l.bf16 %v633
        %v643 = vcombine.high %v623, %v623
        %v645 = vunpack.c.l.s4 1966171168
        %v646 = vunpack.c.0.s8 %v645
        %v647 = vlaneseq
        %v648 = vshrl.u32 %v647, 7
        %v649 = vsub.s32 %v646, %v648
        %v650 = vrot.slane %v623, %v649
        %v652 = vunpack.c.l.s4 1966171168
        %v653 = vunpack.c.0.s8 %v652
        %v654 = vlaneseq
        %v655 = vshrl.u32 %v654, 7
        %v656 = vsub.s32 %v653, %v655
        %v657 = vrot.slane %v643, %v656
        %v658 = vcombine.high %v650, %v650
        %v659 = vcombine.high %v657, %v657
        %v661 = vunpack.c.l.s4 1966171168
        %v662 = vunpack.c.0.s8 %v661
        %v663 = vlaneseq
        %v664 = vshrl.u32 %v663, 7
        %v665 = vsub.s32 %v662, %v664
        %v666 = vrot.slane %v650, %v665
        %v668 = vunpack.c.l.s4 1966171168
        %v669 = vunpack.c.0.s8 %v668
        %v670 = vlaneseq
        %v671 = vshrl.u32 %v670, 7
        %v672 = vsub.s32 %v669, %v671
        %v673 = vrot.slane %v657, %v672
        %v675 = vunpack.c.l.s4 1966171168
        %v676 = vunpack.c.0.s8 %v675
        %v677 = vlaneseq
        %v678 = vshrl.u32 %v677, 7
        %v679 = vsub.s32 %v676, %v678
        %v680 = vrot.slane %v658, %v679
        %v682 = vunpack.c.l.s4 1966171168
        %v683 = vunpack.c.0.s8 %v682
        %v684 = vlaneseq
        %v685 = vshrl.u32 %v684, 7
        %v686 = vsub.s32 %v683, %v685
        %v687 = vrot.slane %v659, %v686
        %v688 = vcombine.high %v666, %v666
        %v689 = vcombine.high %v673, %v673
        %v690 = vcombine.high %v680, %v680
        %v691 = vcombine.high %v687, %v687
        %v692 = vlaneseq
        %v693 = vshrl.u32 %v692, 7
        %v694 = vsub.s32 0, %v693
        %v695 = vrot.slane %v666, %v694
        %v696 = vlaneseq
        %v697 = vshrl.u32 %v696, 7
        %v698 = vsub.s32 0, %v697
        %v699 = vrot.slane %v680, %v698
        %v700 = vlaneseq
        %v701 = vshrl.u32 %v700, 7
        %v702 = vsub.s32 0, %v701
        %v703 = vrot.slane %v688, %v702
        %v704 = vlaneseq
        %v705 = vshrl.u32 %v704, 7
        %v706 = vsub.s32 0, %v705
        %v707 = vrot.slane %v690, %v706
        %v708 = vlaneseq
        %v709 = vshrl.u32 %v708, 7
        %v710 = vsub.s32 0, %v709
        %v711 = vrot.slane %v673, %v710
        %v712 = vlaneseq
        %v713 = vshrl.u32 %v712, 7
        %v714 = vsub.s32 0, %v713
        %v715 = vrot.slane %v687, %v714
        %v716 = vlaneseq
        %v717 = vshrl.u32 %v716, 7
        %v718 = vsub.s32 0, %v717
        %v719 = vrot.slane %v689, %v718
        %v720 = vlaneseq
        %v721 = vshrl.u32 %v720, 7
        %v722 = vsub.s32 0, %v721
        %v723 = vrot.slane %v691, %v722
        %v732 = vmul.f32 %v634, %v695
        %v733 = vmul.f32 %v635, %v699
        %v734 = vmul.f32 %v636, %v703
        %v735 = vmul.f32 %v637, %v707
        %v736 = vmul.f32 %v638, %v711
        %v737 = vmul.f32 %v639, %v715
        %v738 = vmul.f32 %v640, %v719
        %v739 = vmul.f32 %v641, %v723
        %v740 = vsel %vm482, %v732, 0.0
        %741 = vadd.xlane.f32.xlu0 %v740
        %v742 = vpop.xlane.xlu0 %741
        %v743 = vsel %vm482, %v733, 0.0
        %744 = vadd.xlane.f32.xlu0 %v743
        %v745 = vpop.xlane.xlu0 %744
        %v746 = vsel %vm482, %v734, 0.0
        %747 = vadd.xlane.f32.xlu0 %v746
        %v748 = vpop.xlane.xlu0 %747
        %v749 = vsel %vm482, %v735, 0.0
        %750 = vadd.xlane.f32.xlu0 %v749
        %v751 = vpop.xlane.xlu0 %750
        %v752 = vsel %vm482, %v736, 0.0
        %753 = vadd.xlane.f32.xlu0 %v752
        %v754 = vpop.xlane.xlu0 %753
        %v755 = vsel %vm482, %v737, 0.0
        %756 = vadd.xlane.f32.xlu0 %v755
        %v757 = vpop.xlane.xlu0 %756
        %v758 = vsel %vm482, %v738, 0.0
        %759 = vadd.xlane.f32.xlu0 %v758
        %v760 = vpop.xlane.xlu0 %759
        %v761 = vsel %vm482, %v739, 0.0
        %762 = vadd.xlane.f32.xlu0 %v761
        %v763 = vpop.xlane.xlu0 %762
        %v772 = vlaneseq
        %v773 = vand.u32 %v772, 127
        %v774 = vlaneseq
        %v775 = vshrl.u32 %v774, 7
        %v776 = vsub.s32 %v773, %v775
        %v777 = vrot.slane %v742, %v776
        %v778 = vlaneseq
        %v779 = vshrl.u32 %v778, 7
        %v780 = vsub.s32 %v773, %v779
        %v781 = vrot.slane %v745, %v780
        %v782 = vlaneseq
        %v783 = vshrl.u32 %v782, 7
        %v784 = vsub.s32 %v773, %v783
        %v785 = vrot.slane %v748, %v784
        %v786 = vlaneseq
        %v787 = vshrl.u32 %v786, 7
        %v788 = vsub.s32 %v773, %v787
        %v789 = vrot.slane %v751, %v788
        %v790 = vlaneseq
        %v791 = vshrl.u32 %v790, 7
        %v792 = vsub.s32 %v773, %v791
        %v793 = vrot.slane %v754, %v792
        %v794 = vlaneseq
        %v795 = vshrl.u32 %v794, 7
        %v796 = vsub.s32 %v773, %v795
        %v797 = vrot.slane %v757, %v796
        %v798 = vlaneseq
        %v799 = vshrl.u32 %v798, 7
        %v800 = vsub.s32 %v773, %v799
        %v801 = vrot.slane %v760, %v800
        %v802 = vlaneseq
        %v803 = vshrl.u32 %v802, 7
        %v804 = vsub.s32 %v773, %v803
        %v805 = vrot.slane %v763, %v804
        %vm806 = vcmask 1041409
        %v807 = vsel %vm806, %v781, %v777
        %vm808 = vcmask 1042434
        %v809 = vsel %vm808, %v785, %v807
        %vm810 = vcmask 1043459
        %v811 = vsel %vm810, %v789, %v809
        %vm812 = vcmask 1044484
        %v813 = vsel %vm812, %v793, %v811
        %vm814 = vcmask 1045509
        %v815 = vsel %vm814, %v797, %v813
        %vm816 = vcmask 1046534
        %v817 = vsel %vm816, %v801, %v815
        %vm818 = vcmask 1047559
        %v819 = vsel %vm818, %v805, %v817
        %821 = vxpose.xlu0.b32.start [1/16] %v819, 128
        %822 = vxpose.xlu0.b32.cont [2/16] 0.0, 128
        %823 = vxpose.xlu0.b32.cont [3/16] 0.0, 128
        %824 = vxpose.xlu0.b32.cont [4/16] 0.0, 128
        %825 = vxpose.xlu0.b32.cont [5/16] 0.0, 128
        %826 = vxpose.xlu0.b32.cont [6/16] 0.0, 128
        %827 = vxpose.xlu0.b32.cont [7/16] 0.0, 128
        %828 = vxpose.xlu0.b32.cont [8/16] 0.0, 128
        %829 = vxpose.xlu0.b32.cont [9/16] 0.0, 128
        %830 = vxpose.xlu0.b32.cont [10/16] 0.0, 128
        %831 = vxpose.xlu0.b32.cont [11/16] 0.0, 128
        %832 = vxpose.xlu0.b32.cont [12/16] 0.0, 128
        %833 = vxpose.xlu0.b32.cont [13/16] 0.0, 128
        %834 = vxpose.xlu0.b32.cont [14/16] 0.0, 128
        %835 = vxpose.xlu0.b32.cont [15/16] 0.0, 128
        %836 = vxpose.xlu0.b32.end [16/16] 0.0, 128
        %v837 = vpop.trf.xlu0
        %v838 = vpop.trf.xlu0
        %v839 = vpop.trf.xlu0
        %v840 = vpop.trf.xlu0
        %v841 = vpop.trf.xlu0
        %v842 = vpop.trf.xlu0
        %v843 = vpop.trf.xlu0
        %v844 = vpop.trf.xlu0
        %v845 = vpop.trf.xlu0
        %v846 = vpop.trf.xlu0
        %v847 = vpop.trf.xlu0
        %v848 = vpop.trf.xlu0
        %v849 = vpop.trf.xlu0
        %v850 = vpop.trf.xlu0
        %v851 = vpop.trf.xlu0
        %v852 = vpop.trf.xlu0
        %v854 = vsel %vm482, %v455, 0
        %v856 = vsel %vm482, %v623, 0
        %858 = vmatprep.subr.mxu0 0.0
        %859 = vmatpush1.xpose.msra.mxu0 0.0
        %860 = vmatprep.subr.mxu0 0.0
        %861 = vmatpush1.xpose.msra.mxu0 0.0
        %862 = vmatprep.subr.mxu0 0.0
        %863 = vmatpush1.xpose.msra.mxu0 0.0
        %864 = vmatprep.subr.mxu0 0.0
        %865 = vmatpush1.xpose.msra.mxu0 0.0
        %866 = vmatprep.subr.mxu0 0.0
        %867 = vmatpush1.xpose.msra.mxu0 0.0
        %868 = vmatprep.subr.mxu0 0.0
        %869 = vmatpush1.xpose.msra.mxu0 0.0
        %870 = vmatprep.subr.mxu0 0.0
        %871 = vmatpush1.xpose.msra.mxu0 0.0
        %872 = vmatprep.subr.mxu0 0.0
        %873 = vmatpush1.xpose.msra.mxu0 0.0
        %874 = vmatprep.subr.mxu0 0.0
        %875 = vmatpush1.xpose.msra.mxu0 0.0
        %876 = vmatprep.subr.mxu0 0.0
        %877 = vmatpush1.xpose.msra.mxu0 0.0
        %878 = vmatprep.subr.mxu0 0.0
        %879 = vmatpush1.xpose.msra.mxu0 0.0
        %880 = vmatprep.subr.mxu0 0.0
        %881 = vmatpush1.xpose.msra.mxu0 0.0
        %882 = vmatprep.subr.mxu0 0.0
        %883 = vmatpush1.xpose.msra.mxu0 0.0
        %884 = vmatprep.subr.mxu0 0.0
        %885 = vmatpush1.xpose.msra.mxu0 0.0
        %886 = vmatprep.subr.mxu0 0.0
        %887 = vmatpush1.xpose.msra.mxu0 0.0
        %888 = vmatprep.subr.mxu0 0.0
        %889 = vmatpush1.xpose.msra.mxu0 %v856
        %890 = vmatprep.subr.mxu0 0.0
        %891 = vmatpush2.xpose.msra.mxu0 0.0
        %892 = vmatprep.subr.mxu0 0.0
        %893 = vmatpush2.xpose.msra.mxu0 0.0
        %894 = vmatprep.subr.mxu0 0.0
        %895 = vmatpush2.xpose.msra.mxu0 0.0
        %896 = vmatprep.subr.mxu0 0.0
        %897 = vmatpush2.xpose.msra.mxu0 0.0
        %898 = vmatprep.subr.mxu0 0.0
        %899 = vmatpush2.xpose.msra.mxu0 0.0
        %900 = vmatprep.subr.mxu0 0.0
        %901 = vmatpush2.xpose.msra.mxu0 0.0
        %902 = vmatprep.subr.mxu0 0.0
        %903 = vmatpush2.xpose.msra.mxu0 0.0
        %904 = vmatprep.subr.mxu0 0.0
        %905 = vmatpush2.xpose.msra.mxu0 0.0
        %906 = vmatprep.subr.mxu0 0.0
        %907 = vmatpush2.xpose.msra.mxu0 0.0
        %908 = vmatprep.subr.mxu0 0.0
        %909 = vmatpush2.xpose.msra.mxu0 0.0
        %910 = vmatprep.subr.mxu0 0.0
        %911 = vmatpush2.xpose.msra.mxu0 0.0
        %912 = vmatprep.subr.mxu0 0.0
        %913 = vmatpush2.xpose.msra.mxu0 0.0
        %914 = vmatprep.subr.mxu0 0.0
        %915 = vmatpush2.xpose.msra.mxu0 0.0
        %916 = vmatprep.subr.mxu0 0.0
        %917 = vmatpush2.xpose.msra.mxu0 0.0
        %918 = vmatprep.subr.mxu0 0.0
        %919 = vmatpush2.xpose.msra.mxu0 0.0
        %920 = vmatprep.subr.mxu0 0.0
        %921 = vmatpush2.xpose.msra.mxu0 0.0
        %922 = vmatprep.mubr.f32.mxu0 0.0
        %923 = vmatmul.mubr.f32.gmra.mxu0 %v854
        %v924 = vpop.f32.mrf.mxu0
        %v925 = vadd.f32 %v837, %v924
        %v926 = vpop.f32.mrf.mxu0
        %927 = vdwg.mxu0
        %v928 = vmul.f32 %v925, 0.17677669
        %v929 = vsub.f32 1.0, %v456
        %v930 = vmul.f32 %v929, 1e+30
        %v931 = vsub.f32 %v928, %v930
        %vm932 = vcmask 64512
        %v933 = vsel %vm932, %v931, -inf
        %934 = vmax.xlane.f32.xlu0 %v933
        %v935 = vpop.xlane.xlu0 %934
        %v936 = vsub.f32 %v931, %v935
        %v937 = vmul.f32 %v936, 1.442695
        %v938 = vpow.pop %v937
        %v939 = vsel %vm932, %v938, 0.0
        %940 = vadd.xlane.f32.xlu0 %v939
        %v941 = vpop.xlane.xlu0 %940
        %v942 = vrcp.pop %v941
        %v943 = vmul.f32 %v938, %v942
        %v944 = vmul.f32 %v943, %v456
        %945 = vmatprep.subr.mxu0 0.0
        %946 = vmatpush1.msra.mxu0 0.0
        %947 = vmatprep.subr.mxu0 0.0
        %948 = vmatpush1.msra.mxu0 0.0
        %949 = vmatprep.subr.mxu0 0.0
        %950 = vmatpush1.msra.mxu0 0.0
        %951 = vmatprep.subr.mxu0 0.0
        %952 = vmatpush1.msra.mxu0 0.0
        %953 = vmatprep.subr.mxu0 0.0
        %954 = vmatpush1.msra.mxu0 0.0
        %955 = vmatprep.subr.mxu0 0.0
        %956 = vmatpush1.msra.mxu0 0.0
        %957 = vmatprep.subr.mxu0 0.0
        %958 = vmatpush1.msra.mxu0 0.0
        %959 = vmatprep.subr.mxu0 0.0
        %960 = vmatpush1.msra.mxu0 0.0
        %961 = vmatprep.subr.mxu0 0.0
        %962 = vmatpush1.msra.mxu0 0.0
        %963 = vmatprep.subr.mxu0 0.0
        %964 = vmatpush1.msra.mxu0 0.0
        %965 = vmatprep.subr.mxu0 0.0
        %966 = vmatpush1.msra.mxu0 0.0
        %967 = vmatprep.subr.mxu0 0.0
        %968 = vmatpush1.msra.mxu0 0.0
        %969 = vmatprep.subr.mxu0 0.0
        %970 = vmatpush1.msra.mxu0 %v481
        %971 = vmatprep.subr.mxu0 0.0
        %972 = vmatpush1.msra.mxu0 %v480
        %973 = vmatprep.subr.mxu0 0.0
        %974 = vmatpush1.msra.mxu0 %v479
        %975 = vmatprep.subr.mxu0 0.0
        %976 = vmatpush1.msra.mxu0 %v478
        %977 = vmatprep.subr.mxu0 0.0
        %978 = vmatpush2.msra.mxu0 0.0
        %979 = vmatprep.subr.mxu0 0.0
        %980 = vmatpush2.msra.mxu0 0.0
        %981 = vmatprep.subr.mxu0 0.0
        %982 = vmatpush2.msra.mxu0 0.0
        %983 = vmatprep.subr.mxu0 0.0
        %984 = vmatpush2.msra.mxu0 0.0
        %985 = vmatprep.subr.mxu0 0.0
        %986 = vmatpush2.msra.mxu0 0.0
        %987 = vmatprep.subr.mxu0 0.0
        %988 = vmatpush2.msra.mxu0 0.0
        %989 = vmatprep.subr.mxu0 0.0
        %990 = vmatpush2.msra.mxu0 0.0
        %991 = vmatprep.subr.mxu0 0.0
        %992 = vmatpush2.msra.mxu0 0.0
        %993 = vmatprep.subr.mxu0 0.0
        %994 = vmatpush2.msra.mxu0 0.0
        %995 = vmatprep.subr.mxu0 0.0
        %996 = vmatpush2.msra.mxu0 0.0
        %997 = vmatprep.subr.mxu0 0.0
        %998 = vmatpush2.msra.mxu0 0.0
        %999 = vmatprep.subr.mxu0 0.0
        %1000 = vmatpush2.msra.mxu0 0.0
        %1001 = vmatprep.subr.mxu0 0.0
        %1002 = vmatpush2.msra.mxu0 0.0
        %1003 = vmatprep.subr.mxu0 0.0
        %1004 = vmatpush2.msra.mxu0 0.0
        %1005 = vmatprep.subr.mxu0 0.0
        %1006 = vmatpush2.msra.mxu0 0.0
        %1007 = vmatprep.subr.mxu0 0.0
        %1008 = vmatpush2.msra.mxu0 0.0
        %1009 = vmatprep.mubr.f32.mxu0 0.0
        %1010 = vmatmul.mubr.f32.gmra.mxu0 %v484
        %v1011 = vpop.f32.mrf.mxu0
        %v1012 = vadd.f32 0.0, %v1011
        %v1013 = vpop.f32.mrf.mxu0
        %1014 = vdwg.mxu0
        %v1015 = vsel %vm932, %v457, 0.0
        %1016 = vadd.xlane.f32.xlu0 %v1015
        %v1017 = vpop.xlane.xlu0 %1016
        %v1018 = vadd.f32 %v1017, 1e-10
        %v1019 = vrcp.pop %v1018
        %v1020 = vmul.f32 %v457, %v1019
        %v1022 = vsel %vm932, %v1020, 0
        %1024 = vmatprep.subr.mxu0 0.0
        %1025 = vmatpush1.msra.mxu0 0.0
        %1026 = vmatprep.subr.mxu0 0.0
        %1027 = vmatpush1.msra.mxu0 0.0
        %1028 = vmatprep.subr.mxu0 0.0
        %1029 = vmatpush1.msra.mxu0 0.0
        %1030 = vmatprep.subr.mxu0 0.0
        %1031 = vmatpush1.msra.mxu0 0.0
        %1032 = vmatprep.subr.mxu0 0.0
        %1033 = vmatpush1.msra.mxu0 0.0
        %1034 = vmatprep.subr.mxu0 0.0
        %1035 = vmatpush1.msra.mxu0 0.0
        %1036 = vmatprep.subr.mxu0 0.0
        %1037 = vmatpush1.msra.mxu0 0.0
        %1038 = vmatprep.subr.mxu0 0.0
        %1039 = vmatpush1.msra.mxu0 0.0
        %1040 = vmatprep.subr.mxu0 0.0
        %1041 = vmatpush1.msra.mxu0 0.0
        %1042 = vmatprep.subr.mxu0 0.0
        %1043 = vmatpush1.msra.mxu0 0.0
        %1044 = vmatprep.subr.mxu0 0.0
        %1045 = vmatpush1.msra.mxu0 0.0
        %1046 = vmatprep.subr.mxu0 0.0
        %1047 = vmatpush1.msra.mxu0 0.0
        %1048 = vmatprep.subr.mxu0 0.0
        %1049 = vmatpush1.msra.mxu0 0.0
        %1050 = vmatprep.subr.mxu0 0.0
        %1051 = vmatpush1.msra.mxu0 0.0
        %1052 = vmatprep.subr.mxu0 0.0
        %1053 = vmatpush1.msra.mxu0 0.0
        %1054 = vmatprep.subr.mxu0 0.0
        %1055 = vmatpush1.msra.mxu0 %v1012
        %1056 = vmatprep.subr.mxu0 0.0
        %1057 = vmatpush2.msra.mxu0 0.0
        %1058 = vmatprep.subr.mxu0 0.0
        %1059 = vmatpush2.msra.mxu0 0.0
        %1060 = vmatprep.subr.mxu0 0.0
        %1061 = vmatpush2.msra.mxu0 0.0
        %1062 = vmatprep.subr.mxu0 0.0
        %1063 = vmatpush2.msra.mxu0 0.0
        %1064 = vmatprep.subr.mxu0 0.0
        %1065 = vmatpush2.msra.mxu0 0.0
        %1066 = vmatprep.subr.mxu0 0.0
        %1067 = vmatpush2.msra.mxu0 0.0
        %1068 = vmatprep.subr.mxu0 0.0
        %1069 = vmatpush2.msra.mxu0 0.0
        %1070 = vmatprep.subr.mxu0 0.0
        %1071 = vmatpush2.msra.mxu0 0.0
        %1072 = vmatprep.subr.mxu0 0.0
        %1073 = vmatpush2.msra.mxu0 0.0
        %1074 = vmatprep.subr.mxu0 0.0
        %1075 = vmatpush2.msra.mxu0 0.0
        %1076 = vmatprep.subr.mxu0 0.0
        %1077 = vmatpush2.msra.mxu0 0.0
        %1078 = vmatprep.subr.mxu0 0.0
        %1079 = vmatpush2.msra.mxu0 0.0
        %1080 = vmatprep.subr.mxu0 0.0
        %1081 = vmatpush2.msra.mxu0 0.0
        %1082 = vmatprep.subr.mxu0 0.0
        %1083 = vmatpush2.msra.mxu0 0.0
        %1084 = vmatprep.subr.mxu0 0.0
        %1085 = vmatpush2.msra.mxu0 0.0
        %1086 = vmatprep.subr.mxu0 0.0
        %1087 = vmatpush2.msra.mxu0 0.0
        %1088 = vmatprep.mubr.f32.mxu0 0.0
        %1089 = vmatmul.mubr.f32.gmra.mxu0 %v1022
        %v1090 = vpop.f32.mrf.mxu0
        %v1091 = vadd.f32 0.0, %v1090
        %v1092 = vpop.f32.mrf.mxu0
        %1093 = vdwg.mxu0
        %1094 = vmatprep.subr.mxu0 0.0
        %1095 = vmatpush1.msra.mxu0 0.0
        %1096 = vmatprep.subr.mxu0 0.0
        %1097 = vmatpush1.msra.mxu0 0.0
        %1098 = vmatprep.subr.mxu0 0.0
        %1099 = vmatpush1.msra.mxu0 0.0
        %1100 = vmatprep.subr.mxu0 0.0
        %1101 = vmatpush1.msra.mxu0 0.0
        %1102 = vmatprep.subr.mxu0 0.0
        %1103 = vmatpush1.msra.mxu0 0.0
        %1104 = vmatprep.subr.mxu0 0.0
        %1105 = vmatpush1.msra.mxu0 0.0
        %1106 = vmatprep.subr.mxu0 0.0
        %1107 = vmatpush1.msra.mxu0 0.0
        %1108 = vmatprep.subr.mxu0 0.0
        %1109 = vmatpush1.msra.mxu0 0.0
        %1110 = vmatprep.subr.mxu0 0.0
        %1111 = vmatpush1.msra.mxu0 0.0
        %1112 = vmatprep.subr.mxu0 0.0
        %1113 = vmatpush1.msra.mxu0 0.0
        %1114 = vmatprep.subr.mxu0 0.0
        %1115 = vmatpush1.msra.mxu0 0.0
        %1116 = vmatprep.subr.mxu0 0.0
        %1117 = vmatpush1.msra.mxu0 0.0
        %1118 = vmatprep.subr.mxu0 0.0
        %1119 = vmatpush1.msra.mxu0 %v481
        %1120 = vmatprep.subr.mxu0 0.0
        %1121 = vmatpush1.msra.mxu0 %v480
        %1122 = vmatprep.subr.mxu0 0.0
        %1123 = vmatpush1.msra.mxu0 %v479
        %1124 = vmatprep.subr.mxu0 0.0
        %1125 = vmatpush1.msra.mxu0 %v478
        %1126 = vmatprep.subr.mxu0 0.0
        %1127 = vmatpush2.msra.mxu0 0.0
        %1128 = vmatprep.subr.mxu0 0.0
        %1129 = vmatpush2.msra.mxu0 0.0
        %1130 = vmatprep.subr.mxu0 0.0
        %1131 = vmatpush2.msra.mxu0 0.0
        %1132 = vmatprep.subr.mxu0 0.0
        %1133 = vmatpush2.msra.mxu0 0.0
        %1134 = vmatprep.subr.mxu0 0.0
        %1135 = vmatpush2.msra.mxu0 0.0
        %1136 = vmatprep.subr.mxu0 0.0
        %1137 = vmatpush2.msra.mxu0 0.0
        %1138 = vmatprep.subr.mxu0 0.0
        %1139 = vmatpush2.msra.mxu0 0.0
        %1140 = vmatprep.subr.mxu0 0.0
        %1141 = vmatpush2.msra.mxu0 0.0
        %1142 = vmatprep.subr.mxu0 0.0
        %1143 = vmatpush2.msra.mxu0 0.0
        %1144 = vmatprep.subr.mxu0 0.0
        %1145 = vmatpush2.msra.mxu0 0.0
        %1146 = vmatprep.subr.mxu0 0.0
        %1147 = vmatpush2.msra.mxu0 0.0
        %1148 = vmatprep.subr.mxu0 0.0
        %1149 = vmatpush2.msra.mxu0 0.0
        %1150 = vmatprep.subr.mxu0 0.0
        %1151 = vmatpush2.msra.mxu0 0.0
        %1152 = vmatprep.subr.mxu0 0.0
        %1153 = vmatpush2.msra.mxu0 0.0
        %1154 = vmatprep.subr.mxu0 0.0
        %1155 = vmatpush2.msra.mxu0 0.0
        %1156 = vmatprep.subr.mxu0 0.0
        %1157 = vmatpush2.msra.mxu0 0.0
        %1158 = vmatprep.mubr.f32.mxu0 0.0
        %1159 = vmatmul.mubr.f32.gmra.mxu0 %v854
        %v1160 = vpop.f32.mrf.mxu0
        %v1161 = vadd.f32 0.0, %v1160
        %v1162 = vpop.f32.mrf.mxu0
        %1163 = vdwg.mxu0
        %v1165 = vsel %vm932, %v944, 0
        %1167 = vmatprep.subr.mxu0 0.0
        %1168 = vmatpush1.msra.mxu0 0.0
        %1169 = vmatprep.subr.mxu0 0.0
        %1170 = vmatpush1.msra.mxu0 0.0
        %1171 = vmatprep.subr.mxu0 0.0
        %1172 = vmatpush1.msra.mxu0 0.0
        %1173 = vmatprep.subr.mxu0 0.0
        %1174 = vmatpush1.msra.mxu0 0.0
        %1175 = vmatprep.subr.mxu0 0.0
        %1176 = vmatpush1.msra.mxu0 0.0
        %1177 = vmatprep.subr.mxu0 0.0
        %1178 = vmatpush1.msra.mxu0 0.0
        %1179 = vmatprep.subr.mxu0 0.0
        %1180 = vmatpush1.msra.mxu0 0.0
        %1181 = vmatprep.subr.mxu0 0.0
        %1182 = vmatpush1.msra.mxu0 0.0
        %1183 = vmatprep.subr.mxu0 0.0
        %1184 = vmatpush1.msra.mxu0 0.0
        %1185 = vmatprep.subr.mxu0 0.0
        %1186 = vmatpush1.msra.mxu0 0.0
        %1187 = vmatprep.subr.mxu0 0.0
        %1188 = vmatpush1.msra.mxu0 0.0
        %1189 = vmatprep.subr.mxu0 0.0
        %1190 = vmatpush1.msra.mxu0 0.0
        %1191 = vmatprep.subr.mxu0 0.0
        %1192 = vmatpush1.msra.mxu0 0.0
        %1193 = vmatprep.subr.mxu0 0.0
        %1194 = vmatpush1.msra.mxu0 0.0
        %1195 = vmatprep.subr.mxu0 0.0
        %1196 = vmatpush1.msra.mxu0 0.0
        %1197 = vmatprep.subr.mxu0 0.0
        %1198 = vmatpush1.msra.mxu0 %v553
        %1199 = vmatprep.subr.mxu0 0.0
        %1200 = vmatpush2.msra.mxu0 0.0
        %1201 = vmatprep.subr.mxu0 0.0
        %1202 = vmatpush2.msra.mxu0 0.0
        %1203 = vmatprep.subr.mxu0 0.0
        %1204 = vmatpush2.msra.mxu0 0.0
        %1205 = vmatprep.subr.mxu0 0.0
        %1206 = vmatpush2.msra.mxu0 0.0
        %1207 = vmatprep.subr.mxu0 0.0
        %1208 = vmatpush2.msra.mxu0 0.0
        %1209 = vmatprep.subr.mxu0 0.0
        %1210 = vmatpush2.msra.mxu0 0.0
        %1211 = vmatprep.subr.mxu0 0.0
        %1212 = vmatpush2.msra.mxu0 0.0
        %1213 = vmatprep.subr.mxu0 0.0
        %1214 = vmatpush2.msra.mxu0 0.0
        %1215 = vmatprep.subr.mxu0 0.0
        %1216 = vmatpush2.msra.mxu0 0.0
        %1217 = vmatprep.subr.mxu0 0.0
        %1218 = vmatpush2.msra.mxu0 0.0
        %1219 = vmatprep.subr.mxu0 0.0
        %1220 = vmatpush2.msra.mxu0 0.0
        %1221 = vmatprep.subr.mxu0 0.0
        %1222 = vmatpush2.msra.mxu0 0.0
        %1223 = vmatprep.subr.mxu0 0.0
        %1224 = vmatpush2.msra.mxu0 0.0
        %1225 = vmatprep.subr.mxu0 0.0
        %1226 = vmatpush2.msra.mxu0 0.0
        %1227 = vmatprep.subr.mxu0 0.0
        %1228 = vmatpush2.msra.mxu0 0.0
        %1229 = vmatprep.subr.mxu0 0.0
        %1230 = vmatpush2.msra.mxu0 0.0
        %1231 = vmatprep.mubr.f32.mxu0 0.0
        %1232 = vmatmul.mubr.f32.gmra.mxu0 %v1165
        %v1233 = vpop.f32.mrf.mxu0
        %v1234 = vadd.f32 %v1091, %v1233
        %v1235 = vpop.f32.mrf.mxu0
        %1236 = vdwg.mxu0
        %v1237 = vadd.f32 %v1234, %v1161
        %vm1238 = vcmp.gt.f32.partialorder %v1237, 0.0
        %v1239 = vmin.f32 %v1237, 0.0
        %v1240 = vmul.f32 %v1239, 1.442695
        %v1241 = vpow.pop %v1240
        %v1242 = vsub.f32 %v1241, 1.0
        %v1243 = vmul.f32 %v1242, 1.6732632
        %v1244 = vsel %vm1238, %v1237, %v1243
        %v1245 = vmul.f32 %v1244, 1.050701
        %1246 = vst [vmem:[%s434] sm:$0xff] %v1245
        %s1247 = sand.u32 %s251, 1
        %s1248 = scalar_lea.sflag [#allocation4], %s1247
        %s1249 = sand.u32 %s251, 1
        %s1250 = smul.addr %s1249, 8
        %s1251 = scalar_lea.vmem [#allocation7], %s1250
        // Predicated region
        $region61: #{tpu_custom_call.1} parent=51 // pred_check
          %p1252 = pneg %p261
        $region62: #{tpu_custom_call.1} parent=51 // pred_check_branch
          %1254 = sbr.rel (%p1252) target = $region64
        $region63: #{tpu_custom_call.1} parent=51 // pred_region
          %s1256 = ssub.s32 128, 128
          %1257 = vsyncadd %s1248, %s1256
          %s1258 = sadd.s32 %s33, %s32
          %s1259 = smul.addr %s1258, 128
          %s1260 = scalar_lea.hbm %s8, %s1259
          %s1262 = sshll.u32 %s1251, 4
          %s1263 = int_to_ptr.vmem [resolvable:$true] %s1262
          %1265 = dma.vmem_to_hbm [thread:$0]  %s1263, 128, %s1260, %s1248
        $region64: #{tpu_custom_call.1} parent=51 // pred_fallthru
          _
      $region52: #{tpu_custom_call.1} parent=5 // pred_fallthru
        _
      %p1266 = scmp.le.s32.totalorder 2, %s23
      // Predicated region
      $region65: #{tpu_custom_call.1} parent=5 // pred_check
        %p1267 = pneg %p1266
      $region66: #{tpu_custom_call.1} parent=5 // pred_check_branch
        %1269 = sbr.rel (%p1267) target = $region68
      $region67: #{tpu_custom_call.1} parent=5 // pred_region
        %s1270 = ssub.s32 %s23, 2
        // Predicated region
        $region69: #{tpu_custom_call.1} parent=67 // pred_check
          %p1271 = pneg %p267
        $region70: #{tpu_custom_call.1} parent=67 // pred_check_branch
          %1273 = sbr.rel (%p1271) target = $region72
        $region71: #{tpu_custom_call.1} parent=67 // pred_region
          %s1274 = sand.u32 %s252, 1
          %s1275 = scalar_lea.sflag [#allocation4], %s1274
          %s1276 = sand.u32 %s252, 1
          %s1277 = smul.addr %s1276, 8
          %s1278 = scalar_lea.vmem [#allocation7], %s1277
          %1279 = dma.done %s1275, 128
        $region72: #{tpu_custom_call.1} parent=67 // pred_fallthru
          _
      $region68: #{tpu_custom_call.1} parent=5 // pred_fallthru
        _
    $region6: #{tpu_custom_call.1} parent=1 // loop_footer
      %s27 = sadd.s32 1, %s23
    $region7: #{tpu_custom_call.1} parent=1 // loop_footer_branch
      %22 = sbr.rel target = $region3
    $region8: #{tpu_custom_call.1} parent=1 // loop_exit
      _
    %1280 = vsyncpa [#allocation3], 1
    %s1281 = scalar_lea.sflag [#allocation3], 1
    %1282 = vsyncpa %s1281, 1
    %1283 = vsyncpa [#allocation6], 1
    %s1284 = scalar_lea.sflag [#allocation6], 1
    %1285 = vsyncpa %s1284, 1
    %1286 = vsyncpa [#allocation4], 1
    %s1287 = scalar_lea.sflag [#allocation4], 1
    %1288 = vsyncpa %s1287, 1

</llo_original>
